<compile_context>
chip_gen: v6e
topology: v6e:2x2x1
jax: 0.10.0
libtpu: 0.0.40
codegen_flags: <defaults>
</compile_context>

<pallas_src>
import functools
import math

import jax
import jax.numpy as jnp
import numpy as np
from jax.experimental import pallas as pl
from jax.experimental.pallas import tpu as pltpu

LN_EPS = 1e-5


def _layer_norm(y, gamma, beta):
    mean = jnp.mean(y, axis=-1, keepdims=True)
    var = jnp.mean((y - mean) ** 2, axis=-1, keepdims=True)
    return (y - mean) * jax.lax.rsqrt(var + LN_EPS) * gamma + beta


def encoder_kernel(x_ref, wqkv_ref, bqkv_ref, wo_ref, w1_ref, b1_ref, w2_ref, vec_ref,
                   o_ref, *, num_heads, dim_q, dim_k):
    B, T, D = x_ref.shape
    R = B * T
    x = x_ref[...].reshape(R, D)                    # (B*T, D) f32 activations
    xb = x.astype(jnp.bfloat16)                     # MXU inputs in bf16

    # ---- fused Q/K/V projection: one wide MXU matmul, f32 accumulation ----
    # (1/sqrt(dim_q) is already folded into the Q columns of wqkv/bqkv by the wrapper)
    qkv = jnp.dot(xb, wqkv_ref[...], preferred_element_type=jnp.float32) + bqkv_ref[...]
    hq, hk = num_heads * dim_q, num_heads * dim_k
    q_all = qkv[:, :hq]
    k_all = qkv[:, hq:hq + hk]
    v_all = qkv[:, hq + hk:]

    # ---- per-head attention, batched over the batch block (heads are few & static) ----
    heads = []
    for h in range(num_heads):                      # fully unrolled, H is small
        qh = q_all[:, h * dim_q:(h + 1) * dim_q].reshape(B, T, dim_q)
        kh = k_all[:, h * dim_k:(h + 1) * dim_k].reshape(B, T, dim_k)
        vh = v_all[:, h * dim_k:(h + 1) * dim_k].reshape(B, T, dim_k)
        s = jnp.einsum('bqd,bkd->bqk', qh, kh, preferred_element_type=jnp.float32)
        s = s - jnp.max(s, axis=-1, keepdims=True)
        p = jnp.exp(s)
        p = p * pl.reciprocal(jnp.sum(p, axis=-1, keepdims=True), approx=True)
        oh = jnp.einsum('bqk,bkd->bqd', p, vh, preferred_element_type=jnp.float32)
        heads.append(oh.reshape(R, dim_k))

    # ---- fused output projection: concat(heads) @ Wo in one matmul ----
    cat = jnp.concatenate(heads, axis=-1)           # (R, H*dk)
    attn = jnp.dot(cat.astype(jnp.bfloat16), wo_ref[...],
                   preferred_element_type=jnp.float32)
    attn = attn + vec_ref[0:1, :]                   # + bo

    # ---- Residual 1:  x + LayerNorm(attention(x))   (module's Residual ordering) ----
    x1 = x + _layer_norm(attn, vec_ref[1:2, :], vec_ref[2:3, :])

    # ---- feed-forward: Linear -> exact GELU -> Linear ----
    h1 = jnp.dot(x1.astype(jnp.bfloat16), w1_ref[...],
                 preferred_element_type=jnp.float32) + b1_ref[...]
    h1 = 0.5 * h1 * (1.0 + jax.lax.erf(h1 * (1.0 / math.sqrt(2.0))))
    ff = jnp.dot(h1.astype(jnp.bfloat16), w2_ref[...],
                 preferred_element_type=jnp.float32) + vec_ref[3:4, :]   # + b2

    # ---- Residual 2:  x1 + LayerNorm(ff(x1)) ----
    out = x1 + _layer_norm(ff, vec_ref[4:5, :], vec_ref[5:6, :])
    o_ref[...] = out.reshape(B, T, D)


def prepare_params(p):
    """Fold / pack / cast parameters for the kernel.

    - folds the 1/sqrt(dim_q) attention scale into Wq, bq
    - stacks per-head Q/K/V projections into one (D, H*dq + 2*H*dk) matrix
    - flattens the per-head output projection into (H*dk, D)
    - packs the six D-sized vectors (bo, g1, be1, b2, g2, be2) into one (6, D) array
    - casts matmul weights to bf16 (MXU inputs); biases / LN params stay f32
    """
    H, D, dq = p['wq'].shape
    dk = p['wk'].shape[2]
    scale = 1.0 / math.sqrt(dq)

    def stack(w):  # (H, D, d) -> (D, H*d), column index = h*d + j
        return jnp.transpose(w, (1, 0, 2)).reshape(D, -1)

    wqkv = jnp.concatenate(
        [stack(p['wq'] * scale), stack(p['wk']), stack(p['wv'])],
        axis=-1).astype(jnp.bfloat16)
    bqkv = jnp.concatenate(
        [(p['bq'] * scale).reshape(1, -1), p['bk'].reshape(1, -1), p['bv'].reshape(1, -1)],
        axis=-1).astype(jnp.float32)
    wo = p['wo'].reshape(H * dk, D).astype(jnp.bfloat16)
    vec = jnp.stack([p['bo'].reshape(D), p['g1'].reshape(D), p['be1'].reshape(D),
                     p['b2'].reshape(D), p['g2'].reshape(D), p['be2'].reshape(D)]
                    ).astype(jnp.float32)
    return dict(wqkv=wqkv, bqkv=bqkv, wo=wo,
                w1=p['w1'].astype(jnp.bfloat16),
                b1=p['b1'].reshape(1, -1).astype(jnp.float32),
                w2=p['w2'].astype(jnp.bfloat16),
                vec=vec, num_heads=H, dim_q=dq, dim_k=dk)


def transformer_encoder_layer(x, prepared, block_n=None):
    N, T, D = x.shape
    if block_n is None:
        # biggest batch block that still gives >=2 grid steps (both v7x TCs busy),
        # capped so VMEM tiles stay small.
        block_n = max(1, min(N // 2 if N >= 2 else N, 8))
    while N % block_n:          # pick a divisor of N
        block_n -= 1
    grid = (N // block_n,)

    plist = [prepared[k] for k in ('wqkv', 'bqkv', 'wo', 'w1', 'b1', 'w2', 'vec')]

    def const_spec(arr):        # full-array block, same block every grid step
        nd = arr.ndim
        return pl.BlockSpec(arr.shape, lambda n, _nd=nd: (0,) * _nd)

    kernel = functools.partial(encoder_kernel,
                               num_heads=prepared['num_heads'],
                               dim_q=prepared['dim_q'],
                               dim_k=prepared['dim_k'])

    return pl.pallas_call(
        kernel,
        out_shape=jax.ShapeDtypeStruct((N, T, D), jnp.float32),
        grid_spec=pltpu.PrefetchScalarGridSpec(
            num_scalar_prefetch=0,
            grid=grid,
            in_specs=[pl.BlockSpec((block_n, T, D), lambda n: (n, 0, 0))]
                     + [const_spec(a) for a in plist],
            out_specs=pl.BlockSpec((block_n, T, D), lambda n: (n, 0, 0)),
        ),
        compiler_params=pltpu.CompilerParams(
            dimension_semantics=("parallel",),
            vmem_limit_bytes=32 * 1024 * 1024,
        ),
    )(x, *plist)


def ref_forward(x, p, matmul_dtype=jnp.float32):
    """Pure-JAX reference of the PyTorch module (eval mode).

    With matmul_dtype=float32 this is the exact-precision module reference.
    With matmul_dtype=bfloat16 the projection matmuls cast operands to bf16
    (f32 accumulation), mirroring the kernel's MXU input precision.
    """
    def mm(a, w):
        return jnp.dot(a.astype(matmul_dtype), w.astype(matmul_dtype),
                       preferred_element_type=jnp.float32)

    H, D, dq = p['wq'].shape
    heads = []
    for h in range(H):
        q = mm(x, p['wq'][h]) + p['bq'][h]
        k = mm(x, p['wk'][h]) + p['bk'][h]
        v = mm(x, p['wv'][h]) + p['bv'][h]
        s = jnp.einsum('ntd,nsd->nts', q, k) / math.sqrt(dq)
        a = jax.nn.softmax(s, axis=-1)
        heads.append(jnp.einsum('nts,nsd->ntd', a, v))
    cat = jnp.concatenate(heads, axis=-1)
    attn = mm(cat, p['wo'].reshape(-1, D)) + p['bo']

    def ln(y, g, b):
        m = jnp.mean(y, axis=-1, keepdims=True)
        v_ = jnp.mean((y - m) ** 2, axis=-1, keepdims=True)
        return (y - m) / jnp.sqrt(v_ + LN_EPS) * g + b

    x1 = x + ln(attn, p['g1'], p['be1'])
    h1 = jax.nn.gelu(mm(x1, p['w1']) + p['b1'], approximate=False)
    ff = mm(h1, p['w2']) + p['b2']
    return x1 + ln(ff, p['g2'], p['be2'])


if __name__ == "__main__":
    # Small shapes consistent with the (N, T, D) module convention.
    N, T, D = 4, 8, 32
    H, dq, dk, FF = 2, 8, 8, 64     # dq == dk (required by QK^T in the module)

    key = jax.random.PRNGKey(0)
    ks = jax.random.split(key, 16)

    def init(k, shape, scale=0.1):
        return (scale * jax.random.normal(k, shape)).astype(jnp.float32)

    params = {
        # per-head projection weights, pre-transposed to (in, out)
        'wq': init(ks[0], (H, D, dq)), 'bq': init(ks[1], (H, 1, dq)),
        'wk': init(ks[2], (H, D, dk)), 'bk': init(ks[3], (H, 1, dk)),
        'wv': init(ks[4], (H, D, dk)), 'bv': init(ks[5], (H, 1, dk)),
        # output projection split per head: (H, dk, D); bias (1, D)
        'wo': init(ks[6], (H, dk, D)), 'bo': init(ks[7], (1, D)),
        # LayerNorm 1
        'g1': jnp.ones((1, D), jnp.float32), 'be1': jnp.zeros((1, D), jnp.float32),
        # feed-forward
        'w1': init(ks[8], (D, FF)), 'b1': init(ks[9], (1, FF)),
        'w2': init(ks[10], (FF, D)), 'b2': init(ks[11], (1, D)),
        # LayerNorm 2
        'g2': jnp.ones((1, D), jnp.float32), 'be2': jnp.zeros((1, D), jnp.float32),
    }

    x = jax.random.normal(ks[12], (N, T, D)).astype(jnp.float32)

    prepared = prepare_params(params)
    out = jax.block_until_ready(transformer_encoder_layer(x, prepared, block_n=2))

    # bf16-matmul reference mirrors the kernel's MXU input precision; tolerance also
    # covers the approximate (EUP) softmax reciprocal.
    ref = jax.block_until_ready(ref_forward(x, params, matmul_dtype=jnp.bfloat16))
    assert out.shape == (N, T, D)
    err = float(np.max(np.abs(np.asarray(out) - np.asarray(ref))))
    assert np.allclose(np.asarray(out), np.asarray(ref), atol=2e-2, rtol=2e-2), err

    print("KERNEL_OK")
</pallas_src>

<mosaic_0001>
module attributes {stable_mosaic.version = 11 : i64} {
  func.func @encoder_kernel(%arg0: i32, %arg1: memref<2x8x32xf32, #tpu.memory_space<vmem>>, %arg2: memref<32x48xbf16, #tpu.memory_space<vmem>>, %arg3: memref<1x48xf32, #tpu.memory_space<vmem>>, %arg4: memref<16x32xbf16, #tpu.memory_space<vmem>>, %arg5: memref<32x64xbf16, #tpu.memory_space<vmem>>, %arg6: memref<1x64xf32, #tpu.memory_space<vmem>>, %arg7: memref<64x32xbf16, #tpu.memory_space<vmem>>, %arg8: memref<6x32xf32, #tpu.memory_space<vmem>>, %arg9: memref<2x8x32xf32, #tpu.memory_space<vmem>>) attributes {dimension_semantics = [#tpu.dimension_semantics<parallel>], iteration_bounds = array<i64: 2>, scalar_prefetch = 0 : i64, scratch_operands = 0 : i64, tpu.core_type = #tpu.core_type<tc>, window_params = [{transform_indices = @transform_0, window_bounds = array<i64: 2, 8, 32>}, {pipeline_mode = #tpu.pipeline_mode<synchronous>, transform_indices = @transform_1, window_bounds = array<i64: 32, 48>}, {pipeline_mode = #tpu.pipeline_mode<synchronous>, transform_indices = @transform_2, window_bounds = array<i64: 1, 48>}, {pipeline_mode = #tpu.pipeline_mode<synchronous>, transform_indices = @transform_3, window_bounds = array<i64: 16, 32>}, {pipeline_mode = #tpu.pipeline_mode<synchronous>, transform_indices = @transform_4, window_bounds = array<i64: 32, 64>}, {pipeline_mode = #tpu.pipeline_mode<synchronous>, transform_indices = @transform_5, window_bounds = array<i64: 1, 64>}, {pipeline_mode = #tpu.pipeline_mode<synchronous>, transform_indices = @transform_6, window_bounds = array<i64: 64, 32>}, {pipeline_mode = #tpu.pipeline_mode<synchronous>, transform_indices = @transform_7, window_bounds = array<i64: 6, 32>}, {transform_indices = @transform_8, window_bounds = array<i64: 2, 8, 32>}]} {
    %c0 = arith.constant 0 : index
    %c0_0 = arith.constant 0 : index
    %c0_1 = arith.constant 0 : index
    %0 = vector.load %arg1[%c0, %c0_0, %c0_1] : memref<2x8x32xf32, #tpu.memory_space<vmem>>, vector<2x8x32xf32>
    %1 = vector.shape_cast %0 : vector<2x8x32xf32> to vector<16x32xf32>
    %2 = arith.truncf %1 : vector<16x32xf32> to vector<16x32xbf16>
    %c0_2 = arith.constant 0 : index
    %c0_3 = arith.constant 0 : index
    %3 = vector.load %arg2[%c0_2, %c0_3] : memref<32x48xbf16, #tpu.memory_space<vmem>>, vector<32x48xbf16>
    %cst = arith.constant dense<0.000000e+00> : vector<16x48xf32>
    %4 = tpu.matmul %2, %3, %cst {dimension_numbers = #tpu.dot_dimension_numbers<[1], [0], [0], [1], [0, 0, 1, 1], [], []>} : vector<16x32xbf16>, vector<32x48xbf16>, vector<16x48xf32> -> vector<16x48xf32>
    %c0_4 = arith.constant 0 : index
    %c0_5 = arith.constant 0 : index
    %5 = vector.load %arg3[%c0_4, %c0_5] : memref<1x48xf32, #tpu.memory_space<vmem>>, vector<1x48xf32>
    %6 = vector.broadcast %5 : vector<1x48xf32> to vector<16x48xf32>
    %7 = arith.addf %4, %6 : vector<16x48xf32>
    %8 = vector.extract_strided_slice %7 {offsets = [0, 0], sizes = [16, 16], strides = [1, 1]} : vector<16x48xf32> to vector<16x16xf32>
    %9 = vector.extract_strided_slice %7 {offsets = [0, 16], sizes = [16, 16], strides = [1, 1]} : vector<16x48xf32> to vector<16x16xf32>
    %10 = vector.extract_strided_slice %7 {offsets = [0, 32], sizes = [16, 16], strides = [1, 1]} : vector<16x48xf32> to vector<16x16xf32>
    %11 = vector.extract_strided_slice %8 {offsets = [0, 0], sizes = [16, 8], strides = [1, 1]} : vector<16x16xf32> to vector<16x8xf32>
    %12 = vector.shape_cast %11 : vector<16x8xf32> to vector<2x8x8xf32>
    %13 = vector.extract_strided_slice %9 {offsets = [0, 0], sizes = [16, 8], strides = [1, 1]} : vector<16x16xf32> to vector<16x8xf32>
    %14 = vector.shape_cast %13 : vector<16x8xf32> to vector<2x8x8xf32>
    %15 = vector.extract_strided_slice %10 {offsets = [0, 0], sizes = [16, 8], strides = [1, 1]} : vector<16x16xf32> to vector<16x8xf32>
    %16 = vector.shape_cast %15 : vector<16x8xf32> to vector<2x8x8xf32>
    "tpu.trace_start"() <{level = 10 : i32, message = "bqd,bkd->bqk"}> : () -> ()
    %cst_6 = arith.constant dense<0.000000e+00> : vector<2x8x8xf32>
    %17 = tpu.matmul %12, %14, %cst_6 {dimension_numbers = #tpu.dot_dimension_numbers<[2], [2], [1], [1], [0, 0, 0, 1, 1, 1], [0], [0]>} : vector<2x8x8xf32>, vector<2x8x8xf32>, vector<2x8x8xf32> -> vector<2x8x8xf32>
    "tpu.trace_stop"() : () -> ()
    %cst_7 = arith.constant dense<0xFF800000> : vector<2x8xf32>
    %18 = vector.multi_reduction <maximumf>, %17, %cst_7 [2] : vector<2x8x8xf32> to vector<2x8xf32>
    %19 = vector.shape_cast %18 : vector<2x8xf32> to vector<2x8x1xf32>
    %20 = vector.broadcast %19 : vector<2x8x1xf32> to vector<2x8x8xf32>
    %21 = arith.subf %17, %20 : vector<2x8x8xf32>
    %22 = math.exp %21 : vector<2x8x8xf32>
    %cst_8 = arith.constant dense<0.000000e+00> : vector<2x8xf32>
    %23 = vector.multi_reduction <add>, %22, %cst_8 [2] : vector<2x8x8xf32> to vector<2x8xf32>
    %24 = vector.shape_cast %23 : vector<2x8xf32> to vector<2x8x1xf32>
    %25 = tpu.reciprocal %24 {approx = true} : vector<2x8x1xf32> -> vector<2x8x1xf32>
    %26 = vector.broadcast %25 : vector<2x8x1xf32> to vector<2x8x8xf32>
    %27 = arith.mulf %22, %26 : vector<2x8x8xf32>
    "tpu.trace_start"() <{level = 10 : i32, message = "bqk,bkd->bqd"}> : () -> ()
    %cst_9 = arith.constant dense<0.000000e+00> : vector<2x8x8xf32>
    %28 = tpu.matmul %27, %16, %cst_9 {dimension_numbers = #tpu.dot_dimension_numbers<[2], [1], [1], [2], [0, 0, 0, 1, 1, 2], [0], [0]>} : vector<2x8x8xf32>, vector<2x8x8xf32>, vector<2x8x8xf32> -> vector<2x8x8xf32>
    "tpu.trace_stop"() : () -> ()
    %29 = vector.shape_cast %28 : vector<2x8x8xf32> to vector<16x8xf32>
    %30 = vector.extract_strided_slice %8 {offsets = [0, 8], sizes = [16, 8], strides = [1, 1]} : vector<16x16xf32> to vector<16x8xf32>
    %31 = vector.shape_cast %30 : vector<16x8xf32> to vector<2x8x8xf32>
    %32 = vector.extract_strided_slice %9 {offsets = [0, 8], sizes = [16, 8], strides = [1, 1]} : vector<16x16xf32> to vector<16x8xf32>
    %33 = vector.shape_cast %32 : vector<16x8xf32> to vector<2x8x8xf32>
    %34 = vector.extract_strided_slice %10 {offsets = [0, 8], sizes = [16, 8], strides = [1, 1]} : vector<16x16xf32> to vector<16x8xf32>
    %35 = vector.shape_cast %34 : vector<16x8xf32> to vector<2x8x8xf32>
    "tpu.trace_start"() <{level = 10 : i32, message = "bqd,bkd->bqk"}> : () -> ()
    %cst_10 = arith.constant dense<0.000000e+00> : vector<2x8x8xf32>
    %36 = tpu.matmul %31, %33, %cst_10 {dimension_numbers = #tpu.dot_dimension_numbers<[2], [2], [1], [1], [0, 0, 0, 1, 1, 1], [0], [0]>} : vector<2x8x8xf32>, vector<2x8x8xf32>, vector<2x8x8xf32> -> vector<2x8x8xf32>
    "tpu.trace_stop"() : () -> ()
    %cst_11 = arith.constant dense<0xFF800000> : vector<2x8xf32>
    %37 = vector.multi_reduction <maximumf>, %36, %cst_11 [2] : vector<2x8x8xf32> to vector<2x8xf32>
    %38 = vector.shape_cast %37 : vector<2x8xf32> to vector<2x8x1xf32>
    %39 = vector.broadcast %38 : vector<2x8x1xf32> to vector<2x8x8xf32>
    %40 = arith.subf %36, %39 : vector<2x8x8xf32>
    %41 = math.exp %40 : vector<2x8x8xf32>
    %cst_12 = arith.constant dense<0.000000e+00> : vector<2x8xf32>
    %42 = vector.multi_reduction <add>, %41, %cst_12 [2] : vector<2x8x8xf32> to vector<2x8xf32>
    %43 = vector.shape_cast %42 : vector<2x8xf32> to vector<2x8x1xf32>
    %44 = tpu.reciprocal %43 {approx = true} : vector<2x8x1xf32> -> vector<2x8x1xf32>
    %45 = vector.broadcast %44 : vector<2x8x1xf32> to vector<2x8x8xf32>
    %46 = arith.mulf %41, %45 : vector<2x8x8xf32>
    "tpu.trace_start"() <{level = 10 : i32, message = "bqk,bkd->bqd"}> : () -> ()
    %cst_13 = arith.constant dense<0.000000e+00> : vector<2x8x8xf32>
    %47 = tpu.matmul %46, %35, %cst_13 {dimension_numbers = #tpu.dot_dimension_numbers<[2], [1], [1], [2], [0, 0, 0, 1, 1, 2], [0], [0]>} : vector<2x8x8xf32>, vector<2x8x8xf32>, vector<2x8x8xf32> -> vector<2x8x8xf32>
    "tpu.trace_stop"() : () -> ()
    %48 = vector.shape_cast %47 : vector<2x8x8xf32> to vector<16x8xf32>
    %49 = tpu.concatenate %29, %48 in 1 : vector<16x8xf32>, vector<16x8xf32> -> vector<16x16xf32>
    %50 = arith.truncf %49 : vector<16x16xf32> to vector<16x16xbf16>
    %c0_14 = arith.constant 0 : index
    %c0_15 = arith.constant 0 : index
    %51 = vector.load %arg4[%c0_14, %c0_15] : memref<16x32xbf16, #tpu.memory_space<vmem>>, vector<16x32xbf16>
    %cst_16 = arith.constant dense<0.000000e+00> : vector<16x32xf32>
    %52 = tpu.matmul %50, %51, %cst_16 {dimension_numbers = #tpu.dot_dimension_numbers<[1], [0], [0], [1], [0, 0, 1, 1], [], []>} : vector<16x16xbf16>, vector<16x32xbf16>, vector<16x32xf32> -> vector<16x32xf32>
    %c0_17 = arith.constant 0 : index
    %c0_18 = arith.constant 0 : index
    %53 = vector.load %arg8[%c0_17, %c0_18] : memref<6x32xf32, #tpu.memory_space<vmem>>, vector<1x32xf32>
    %54 = vector.broadcast %53 : vector<1x32xf32> to vector<16x32xf32>
    %55 = arith.addf %52, %54 : vector<16x32xf32>
    %c1 = arith.constant 1 : index
    %c0_19 = arith.constant 0 : index
    %56 = vector.load %arg8[%c1, %c0_19] : memref<6x32xf32, #tpu.memory_space<vmem>>, vector<1x32xf32>
    %c2 = arith.constant 2 : index
    %c0_20 = arith.constant 0 : index
    %57 = vector.load %arg8[%c2, %c0_20] : memref<6x32xf32, #tpu.memory_space<vmem>>, vector<1x32xf32>
    %cst_21 = arith.constant dense<0.000000e+00> : vector<16xf32>
    %58 = vector.multi_reduction <add>, %55, %cst_21 [1] : vector<16x32xf32> to vector<16xf32>
    %59 = vector.shape_cast %58 : vector<16xf32> to vector<16x1xf32>
    %cst_22 = arith.constant 3.200000e+01 : f32
    %60 = vector.broadcast %cst_22 : f32 to vector<16x1xf32>
    %61 = arith.divf %59, %60 : vector<16x1xf32>
    %62 = vector.broadcast %61 : vector<16x1xf32> to vector<16x32xf32>
    %63 = arith.subf %55, %62 : vector<16x32xf32>
    %64 = arith.mulf %63, %63 : vector<16x32xf32>
    %cst_23 = arith.constant dense<0.000000e+00> : vector<16xf32>
    %65 = vector.multi_reduction <add>, %64, %cst_23 [1] : vector<16x32xf32> to vector<16xf32>
    %66 = vector.shape_cast %65 : vector<16xf32> to vector<16x1xf32>
    %cst_24 = arith.constant 3.200000e+01 : f32
    %67 = vector.broadcast %cst_24 : f32 to vector<16x1xf32>
    %68 = arith.divf %66, %67 : vector<16x1xf32>
    %69 = vector.broadcast %61 : vector<16x1xf32> to vector<16x32xf32>
    %70 = arith.subf %55, %69 : vector<16x32xf32>
    %cst_25 = arith.constant 9.99999974E-6 : f32
    %71 = vector.broadcast %cst_25 : f32 to vector<16x1xf32>
    %72 = arith.addf %68, %71 : vector<16x1xf32>
    %73 = math.rsqrt %72 : vector<16x1xf32>
    %74 = vector.broadcast %73 : vector<16x1xf32> to vector<16x32xf32>
    %75 = arith.mulf %70, %74 : vector<16x32xf32>
    %76 = vector.broadcast %56 : vector<1x32xf32> to vector<16x32xf32>
    %77 = arith.mulf %75, %76 : vector<16x32xf32>
    %78 = vector.broadcast %57 : vector<1x32xf32> to vector<16x32xf32>
    %79 = arith.addf %77, %78 : vector<16x32xf32>
    %80 = arith.addf %1, %79 : vector<16x32xf32>
    %81 = arith.truncf %80 : vector<16x32xf32> to vector<16x32xbf16>
    %c0_26 = arith.constant 0 : index
    %c0_27 = arith.constant 0 : index
    %82 = vector.load %arg5[%c0_26, %c0_27] : memref<32x64xbf16, #tpu.memory_space<vmem>>, vector<32x64xbf16>
    %cst_28 = arith.constant dense<0.000000e+00> : vector<16x64xf32>
    %83 = tpu.matmul %81, %82, %cst_28 {dimension_numbers = #tpu.dot_dimension_numbers<[1], [0], [0], [1], [0, 0, 1, 1], [], []>} : vector<16x32xbf16>, vector<32x64xbf16>, vector<16x64xf32> -> vector<16x64xf32>
    %c0_29 = arith.constant 0 : index
    %c0_30 = arith.constant 0 : index
    %84 = vector.load %arg6[%c0_29, %c0_30] : memref<1x64xf32, #tpu.memory_space<vmem>>, vector<1x64xf32>
    %85 = vector.broadcast %84 : vector<1x64xf32> to vector<16x64xf32>
    %86 = arith.addf %83, %85 : vector<16x64xf32>
    %cst_31 = arith.constant 5.000000e-01 : f32
    %87 = vector.broadcast %cst_31 : f32 to vector<16x64xf32>
    %88 = arith.mulf %87, %86 : vector<16x64xf32>
    %cst_32 = arith.constant 0.707106769 : f32
    %89 = vector.broadcast %cst_32 : f32 to vector<16x64xf32>
    %90 = arith.mulf %86, %89 : vector<16x64xf32>
    %91 = math.erf %90 : vector<16x64xf32>
    %cst_33 = arith.constant 1.000000e+00 : f32
    %92 = vector.broadcast %cst_33 : f32 to vector<16x64xf32>
    %93 = arith.addf %92, %91 : vector<16x64xf32>
    %94 = arith.mulf %88, %93 : vector<16x64xf32>
    %95 = arith.truncf %94 : vector<16x64xf32> to vector<16x64xbf16>
    %c0_34 = arith.constant 0 : index
    %c0_35 = arith.constant 0 : index
    %96 = vector.load %arg7[%c0_34, %c0_35] : memref<64x32xbf16, #tpu.memory_space<vmem>>, vector<64x32xbf16>
    %cst_36 = arith.constant dense<0.000000e+00> : vector<16x32xf32>
    %97 = tpu.matmul %95, %96, %cst_36 {dimension_numbers = #tpu.dot_dimension_numbers<[1], [0], [0], [1], [0, 0, 1, 1], [], []>} : vector<16x64xbf16>, vector<64x32xbf16>, vector<16x32xf32> -> vector<16x32xf32>
    %c3 = arith.constant 3 : index
    %c0_37 = arith.constant 0 : index
    %98 = vector.load %arg8[%c3, %c0_37] : memref<6x32xf32, #tpu.memory_space<vmem>>, vector<1x32xf32>
    %99 = vector.broadcast %98 : vector<1x32xf32> to vector<16x32xf32>
    %100 = arith.addf %97, %99 : vector<16x32xf32>
    %c4 = arith.constant 4 : index
    %c0_38 = arith.constant 0 : index
    %101 = vector.load %arg8[%c4, %c0_38] : memref<6x32xf32, #tpu.memory_space<vmem>>, vector<1x32xf32>
    %c5 = arith.constant 5 : index
    %c0_39 = arith.constant 0 : index
    %102 = vector.load %arg8[%c5, %c0_39] : memref<6x32xf32, #tpu.memory_space<vmem>>, vector<1x32xf32>
    %cst_40 = arith.constant dense<0.000000e+00> : vector<16xf32>
    %103 = vector.multi_reduction <add>, %100, %cst_40 [1] : vector<16x32xf32> to vector<16xf32>
    %104 = vector.shape_cast %103 : vector<16xf32> to vector<16x1xf32>
    %cst_41 = arith.constant 3.200000e+01 : f32
    %105 = vector.broadcast %cst_41 : f32 to vector<16x1xf32>
    %106 = arith.divf %104, %105 : vector<16x1xf32>
    %107 = vector.broadcast %106 : vector<16x1xf32> to vector<16x32xf32>
    %108 = arith.subf %100, %107 : vector<16x32xf32>
    %109 = arith.mulf %108, %108 : vector<16x32xf32>
    %cst_42 = arith.constant dense<0.000000e+00> : vector<16xf32>
    %110 = vector.multi_reduction <add>, %109, %cst_42 [1] : vector<16x32xf32> to vector<16xf32>
    %111 = vector.shape_cast %110 : vector<16xf32> to vector<16x1xf32>
    %cst_43 = arith.constant 3.200000e+01 : f32
    %112 = vector.broadcast %cst_43 : f32 to vector<16x1xf32>
    %113 = arith.divf %111, %112 : vector<16x1xf32>
    %114 = vector.broadcast %106 : vector<16x1xf32> to vector<16x32xf32>
    %115 = arith.subf %100, %114 : vector<16x32xf32>
    %cst_44 = arith.constant 9.99999974E-6 : f32
    %116 = vector.broadcast %cst_44 : f32 to vector<16x1xf32>
    %117 = arith.addf %113, %116 : vector<16x1xf32>
    %118 = math.rsqrt %117 : vector<16x1xf32>
    %119 = vector.broadcast %118 : vector<16x1xf32> to vector<16x32xf32>
    %120 = arith.mulf %115, %119 : vector<16x32xf32>
    %121 = vector.broadcast %101 : vector<1x32xf32> to vector<16x32xf32>
    %122 = arith.mulf %120, %121 : vector<16x32xf32>
    %123 = vector.broadcast %102 : vector<1x32xf32> to vector<16x32xf32>
    %124 = arith.addf %122, %123 : vector<16x32xf32>
    %125 = arith.addf %80, %124 : vector<16x32xf32>
    %126 = vector.shape_cast %125 : vector<16x32xf32> to vector<2x8x32xf32>
    %c0_45 = arith.constant 0 : index
    %c0_46 = arith.constant 0 : index
    %c0_47 = arith.constant 0 : index
    %127 = vector.load %arg9[%c0_45, %c0_46, %c0_47] : memref<2x8x32xf32, #tpu.memory_space<vmem>>, vector<2x8x32xf32>
    tpu.vector_store %arg9[%c0_45, %c0_46, %c0_47], %126 {strides = array<i32>} : memref<2x8x32xf32, #tpu.memory_space<vmem>>, vector<2x8x32xf32>,
    return
  }
  func.func @transform_0(%arg0: i32) -> (i32, i32, i32) {
    %c0_i32 = arith.constant 0 : i32
    %c0_i32_0 = arith.constant 0 : i32
    %c0_i32_1 = arith.constant 0 : i32
    return %arg0, %c0_i32, %c0_i32_0 : i32, i32, i32
  }
  func.func @transform_1(%arg0: i32) -> (i32, i32) {
    %c0_i32 = arith.constant 0 : i32
    %c0_i32_0 = arith.constant 0 : i32
    %c0_i32_1 = arith.constant 0 : i32
    return %c0_i32, %c0_i32_0 : i32, i32
  }
  func.func @transform_2(%arg0: i32) -> (i32, i32) {
    %c0_i32 = arith.constant 0 : i32
    %c0_i32_0 = arith.constant 0 : i32
    %c0_i32_1 = arith.constant 0 : i32
    return %c0_i32, %c0_i32_0 : i32, i32
  }
  func.func @transform_3(%arg0: i32) -> (i32, i32) {
    %c0_i32 = arith.constant 0 : i32
    %c0_i32_0 = arith.constant 0 : i32
    %c0_i32_1 = arith.constant 0 : i32
    return %c0_i32, %c0_i32_0 : i32, i32
  }
  func.func @transform_4(%arg0: i32) -> (i32, i32) {
    %c0_i32 = arith.constant 0 : i32
    %c0_i32_0 = arith.constant 0 : i32
    %c0_i32_1 = arith.constant 0 : i32
    return %c0_i32, %c0_i32_0 : i32, i32
  }
  func.func @transform_5(%arg0: i32) -> (i32, i32) {
    %c0_i32 = arith.constant 0 : i32
    %c0_i32_0 = arith.constant 0 : i32
    %c0_i32_1 = arith.constant 0 : i32
    return %c0_i32, %c0_i32_0 : i32, i32
  }
  func.func @transform_6(%arg0: i32) -> (i32, i32) {
    %c0_i32 = arith.constant 0 : i32
    %c0_i32_0 = arith.constant 0 : i32
    %c0_i32_1 = arith.constant 0 : i32
    return %c0_i32, %c0_i32_0 : i32, i32
  }
  func.func @transform_7(%arg0: i32) -> (i32, i32) {
    %c0_i32 = arith.constant 0 : i32
    %c0_i32_0 = arith.constant 0 : i32
    %c0_i32_1 = arith.constant 0 : i32
    return %c0_i32, %c0_i32_0 : i32, i32
  }
  func.func @transform_8(%arg0: i32) -> (i32, i32, i32) {
    %c0_i32 = arith.constant 0 : i32
    %c0_i32_0 = arith.constant 0 : i32
    %c0_i32_1 = arith.constant 0 : i32
    return %arg0, %c0_i32, %c0_i32_0 : i32, i32, i32
  }
}

</mosaic_0001>

<llo_original>
// kernel: tpu_custom_call.1
$region0: #{tpu_custom_call.1}
  #allocation0 [shape = 'u32[]', space=smem, size = 0x4, offset = 0x4, fixed_abs, tag = 'smem constant byte address 0x4 - core index']
  #allocation1 [shape = 'u32[144,128]{1,0:T(1,128)}', space=vmem, size = 0x12000, scoped, tag = 'internal scratch']
  %s0 = inlined_call_operand.vmem [shape: f32[4,8,32], index: 0, kind: input, shape index: {}]
  %s1 = inlined_call_operand.vmem [shape: bf16[32,48], index: 1, kind: input, shape index: {}]
  %s2 = inlined_call_operand.vmem [shape: f32[1,48], index: 2, kind: input, shape index: {}]
  %s3 = inlined_call_operand.hbm [shape: bf16[16,32], index: 3, kind: input, shape index: {}]
  %s4 = inlined_call_operand.hbm [shape: bf16[32,64], index: 4, kind: input, shape index: {}]
  %s5 = inlined_call_operand.hbm [shape: f32[1,64], index: 5, kind: input, shape index: {}]
  %s6 = inlined_call_operand.vmem [shape: bf16[64,32], index: 6, kind: input, shape index: {}]
  %s7 = inlined_call_operand.vmem [shape: f32[6,32], index: 7, kind: input, shape index: {}]
  %s8 = inlined_call_operand.hbm [shape: f32[4,8,32], index: 8, kind: output, shape index: {}]
  %s9 = sld [smem:[#allocation0]]
  $region77: #{tpu_custom_call.1} parent=0
    _
  %s11 = ssub.s32 1, %s9
  %s12 = scalar_select 0, %s11, %s9
  $region1: #{tpu_custom_call.1} parent=0
    #allocation2 [shape = 'u8[4096]{0}', space=vmem, size = 0x1000, scoped, tag = 'input window, operand 3, single buffered']
    #allocation3 [shape = 's32[2]{0}', space=sflag, size = 0x8, scoped, tag = 'scoped memory for tpu_custom_call.1']
    #allocation4 [shape = 's32[2]{0}', space=sflag, size = 0x8, scoped, tag = 'scoped memory for tpu_custom_call.1']
    #allocation5 [shape = 'u8[8192]{0}', space=vmem, size = 0x2000, scoped, tag = 'input window, operand 4, single buffered']
    #allocation6 [shape = 's32[1]{0}', space=sflag, size = 0x4, scoped, tag = 'scoped memory for tpu_custom_call.1']
    #allocation7 [shape = 'u8[512]{0}', space=vmem, size = 0x400, scoped, tag = 'input window, operand 5, single buffered']
    #allocation8 [shape = 'u8[16384]{0}', space=vmem, size = 0x4000, scoped, tag = 'output window, operand 0']
    %13 = vsyncpa [#allocation3], 0
    %14 = vsyncpa [#allocation6], 0
    %15 = vsyncpa [#allocation4], 0
    %s16 = scalar_lea.sflag [#allocation4], 1
    %17 = vsyncpa %s16, 0
    loop: start=0, step=1, limit=4
    $region2: #{tpu_custom_call.1} parent=1 // loop_pre_header
      _
    $region3: #{tpu_custom_call.1} parent=1 // loop_header
      %s19 = sphi 0, %s23
      %p20 = scmp.ge.s32.totalorder %s19, 4
      %s29 = sphi 0, %s31
      %s32 = sphi 0, %s29
      %s33 = sphi 0, %s32
      %s49 = sphi 0, %s33
      %s53 = sphi 0, %s53
      %s55 = sphi 0, %s53
      %s56 = sphi 0, %s55
      %s70 = sphi 0, %s56
      %s74 = sphi 0, %s74
      %s76 = sphi 0, %s74
      %s77 = sphi 0, %s76
      %s91 = sphi 0, %s77
      %s95 = sphi 0, %s95
      %s97 = sphi 0, %s95
      %s98 = sphi 0, %s97
      %s112 = sphi 0, %s98
      %s116 = sphi 0, %s116
      %s118 = sphi 0, %s116
      %s119 = sphi 0, %s118
      %s133 = sphi 0, %s119
      %s137 = sphi 0, %s137
      %s139 = sphi 0, %s137
      %s140 = sphi 0, %s139
      %s154 = sphi 0, %s140
      %s158 = sphi 0, %s158
      %s160 = sphi 0, %s158
      %s161 = sphi 0, %s160
      %s175 = sphi 0, %s161
      %s179 = sphi 0, %s179
      %s181 = sphi 0, %s179
      %s182 = sphi 0, %s181
      %s196 = sphi 0, %s182
      %s202 = sphi 0, %s204
      %s205 = sphi 0, %s202
      %s206 = sphi 0, %s205
      %s222 = sphi 0, %s206
    $region4: #{tpu_custom_call.1} parent=1 // loop_header_branch
      %22 = sbr.rel (%p20) target = $region8
    $region5: #{tpu_custom_call.1} parent=1 // loop_body
      %s24 = ssub.s32 %s19, 1
      %s25 = ssub.s32 %s19, 2
      %s26 = sadd.s32 %s19, 1
      %s27 = ssub.s32 %s19, %s26
      %p28 = scmp.eq.s32.totalorder %s27, 0
      %s30 = sadd.s32 %s29, 1
      %s31 = scalar_select %p28, %s29, %s30
      %p34 = pneg %p28
      %p35 = scmp.eq.s32.totalorder %s19, 1
      %p36 = por %p34, %p35
      %p37 = scmp.ne.s32.totalorder %s29, %s32
      %p38 = scmp.eq.s32.totalorder %s19, 0
      %p39 = por %p37, %p38
      %p40 = scmp.ne.s32.totalorder %s29, %s32
      %p41 = scmp.eq.s32.totalorder %s24, 1
      %p42 = por %p40, %p41
      %p43 = scmp.ne.s32.totalorder %s32, %s33
      %p44 = scmp.eq.s32.totalorder %s24, 0
      %p45 = por %p43, %p44
      %p46 = scmp.ne.s32.totalorder %s32, %s33
      %p47 = scmp.eq.s32.totalorder %s25, 1
      %p48 = por %p46, %p47
      %p50 = scmp.ne.s32.totalorder %s33, %s49
      %p51 = scmp.eq.s32.totalorder %s25, 0
      %p52 = por %p50, %p51
      %s54 = sadd.s32 %s53, 1
      %p57 = scmp.eq.s32.totalorder %s19, 1
      %p58 = scmp.ne.s32.totalorder %s53, %s55
      %p59 = scmp.eq.s32.totalorder %s19, 0
      %p60 = por %p58, %p59
      %p61 = scmp.ne.s32.totalorder %s53, %s55
      %p62 = scmp.eq.s32.totalorder %s24, 1
      %p63 = por %p61, %p62
      %p64 = scmp.ne.s32.totalorder %s55, %s56
      %p65 = scmp.eq.s32.totalorder %s24, 0
      %p66 = por %p64, %p65
      %p67 = scmp.ne.s32.totalorder %s55, %s56
      %p68 = scmp.eq.s32.totalorder %s25, 1
      %p69 = por %p67, %p68
      %p71 = scmp.ne.s32.totalorder %s56, %s70
      %p72 = scmp.eq.s32.totalorder %s25, 0
      %p73 = por %p71, %p72
      %s75 = sadd.s32 %s74, 1
      %p78 = scmp.eq.s32.totalorder %s19, 1
      %p79 = scmp.ne.s32.totalorder %s74, %s76
      %p80 = scmp.eq.s32.totalorder %s19, 0
      %p81 = por %p79, %p80
      %p82 = scmp.ne.s32.totalorder %s74, %s76
      %p83 = scmp.eq.s32.totalorder %s24, 1
      %p84 = por %p82, %p83
      %p85 = scmp.ne.s32.totalorder %s76, %s77
      %p86 = scmp.eq.s32.totalorder %s24, 0
      %p87 = por %p85, %p86
      %p88 = scmp.ne.s32.totalorder %s76, %s77
      %p89 = scmp.eq.s32.totalorder %s25, 1
      %p90 = por %p88, %p89
      %p92 = scmp.ne.s32.totalorder %s77, %s91
      %p93 = scmp.eq.s32.totalorder %s25, 0
      %p94 = por %p92, %p93
      %s96 = sadd.s32 %s95, 1
      %p99 = scmp.eq.s32.totalorder %s19, 1
      %p100 = scmp.ne.s32.totalorder %s95, %s97
      %p101 = scmp.eq.s32.totalorder %s19, 0
      %p102 = por %p100, %p101
      %p103 = scmp.ne.s32.totalorder %s95, %s97
      %p104 = scmp.eq.s32.totalorder %s24, 1
      %p105 = por %p103, %p104
      %p106 = scmp.ne.s32.totalorder %s97, %s98
      %p107 = scmp.eq.s32.totalorder %s24, 0
      %p108 = por %p106, %p107
      %p109 = scmp.ne.s32.totalorder %s97, %s98
      %p110 = scmp.eq.s32.totalorder %s25, 1
      %p111 = por %p109, %p110
      %p113 = scmp.ne.s32.totalorder %s98, %s112
      %p114 = scmp.eq.s32.totalorder %s25, 0
      %p115 = por %p113, %p114
      %s117 = sadd.s32 %s116, 1
      %p120 = scmp.eq.s32.totalorder %s19, 1
      %p121 = scmp.ne.s32.totalorder %s116, %s118
      %p122 = scmp.eq.s32.totalorder %s19, 0
      %p123 = por %p121, %p122
      %p124 = scmp.ne.s32.totalorder %s116, %s118
      %p125 = scmp.eq.s32.totalorder %s24, 1
      %p126 = por %p124, %p125
      %p127 = scmp.ne.s32.totalorder %s118, %s119
      %p128 = scmp.eq.s32.totalorder %s24, 0
      %p129 = por %p127, %p128
      %p130 = scmp.ne.s32.totalorder %s118, %s119
      %p131 = scmp.eq.s32.totalorder %s25, 1
      %p132 = por %p130, %p131
      %p134 = scmp.ne.s32.totalorder %s119, %s133
      %p135 = scmp.eq.s32.totalorder %s25, 0
      %p136 = por %p134, %p135
      %s138 = sadd.s32 %s137, 1
      %p141 = scmp.eq.s32.totalorder %s19, 1
      %p142 = scmp.ne.s32.totalorder %s137, %s139
      %p143 = scmp.eq.s32.totalorder %s19, 0
      %p144 = por %p142, %p143
      %p145 = scmp.ne.s32.totalorder %s137, %s139
      %p146 = scmp.eq.s32.totalorder %s24, 1
      %p147 = por %p145, %p146
      %p148 = scmp.ne.s32.totalorder %s139, %s140
      %p149 = scmp.eq.s32.totalorder %s24, 0
      %p150 = por %p148, %p149
      %p151 = scmp.ne.s32.totalorder %s139, %s140
      %p152 = scmp.eq.s32.totalorder %s25, 1
      %p153 = por %p151, %p152
      %p155 = scmp.ne.s32.totalorder %s140, %s154
      %p156 = scmp.eq.s32.totalorder %s25, 0
      %p157 = por %p155, %p156
      %s159 = sadd.s32 %s158, 1
      %p162 = scmp.eq.s32.totalorder %s19, 1
      %p163 = scmp.ne.s32.totalorder %s158, %s160
      %p164 = scmp.eq.s32.totalorder %s19, 0
      %p165 = por %p163, %p164
      %p166 = scmp.ne.s32.totalorder %s158, %s160
      %p167 = scmp.eq.s32.totalorder %s24, 1
      %p168 = por %p166, %p167
      %p169 = scmp.ne.s32.totalorder %s160, %s161
      %p170 = scmp.eq.s32.totalorder %s24, 0
      %p171 = por %p169, %p170
      %p172 = scmp.ne.s32.totalorder %s160, %s161
      %p173 = scmp.eq.s32.totalorder %s25, 1
      %p174 = por %p172, %p173
      %p176 = scmp.ne.s32.totalorder %s161, %s175
      %p177 = scmp.eq.s32.totalorder %s25, 0
      %p178 = por %p176, %p177
      %s180 = sadd.s32 %s179, 1
      %p183 = scmp.eq.s32.totalorder %s19, 1
      %p184 = scmp.ne.s32.totalorder %s179, %s181
      %p185 = scmp.eq.s32.totalorder %s19, 0
      %p186 = por %p184, %p185
      %p187 = scmp.ne.s32.totalorder %s179, %s181
      %p188 = scmp.eq.s32.totalorder %s24, 1
      %p189 = por %p187, %p188
      %p190 = scmp.ne.s32.totalorder %s181, %s182
      %p191 = scmp.eq.s32.totalorder %s24, 0
      %p192 = por %p190, %p191
      %p193 = scmp.ne.s32.totalorder %s181, %s182
      %p194 = scmp.eq.s32.totalorder %s25, 1
      %p195 = por %p193, %p194
      %p197 = scmp.ne.s32.totalorder %s182, %s196
      %p198 = scmp.eq.s32.totalorder %s25, 0
      %p199 = por %p197, %p198
      %s200 = ssub.s32 %s19, %s26
      %p201 = scmp.eq.s32.totalorder %s200, 0
      %s203 = sadd.s32 %s202, 1
      %s204 = scalar_select %p201, %s202, %s203
      %p207 = pneg %p201
      %p208 = scmp.eq.s32.totalorder %s19, 1
      %p209 = por %p207, %p208
      %p210 = scmp.ne.s32.totalorder %s202, %s205
      %p211 = scmp.eq.s32.totalorder %s19, 0
      %p212 = por %p210, %p211
      %p213 = scmp.ne.s32.totalorder %s202, %s205
      %p214 = scmp.eq.s32.totalorder %s24, 1
      %p215 = por %p213, %p214
      %p216 = scmp.ne.s32.totalorder %s205, %s206
      %p217 = scmp.eq.s32.totalorder %s24, 0
      %p218 = por %p216, %p217
      %p219 = scmp.ne.s32.totalorder %s205, %s206
      %p220 = scmp.eq.s32.totalorder %s25, 1
      %p221 = por %p219, %p220
      %p223 = scmp.ne.s32.totalorder %s206, %s222
      %p224 = scmp.eq.s32.totalorder %s25, 0
      %p225 = por %p223, %p224
      %p226 = scmp.le.s32.totalorder 1, %s19
      %p227 = scmp.lt.s32.totalorder %s19, 3
      %p228 = pnand %p226, %p227
      %p229 = pneg %p228
      // Predicated region
      $region9: #{tpu_custom_call.1} parent=5 // pred_check
        _
      $region10: #{tpu_custom_call.1} parent=5 // pred_check_branch
        %231 = sbr.rel (%p228) target = $region12
      $region11: #{tpu_custom_call.1} parent=5 // pred_region
        %s232 = ssub.s32 %s19, 1
        // Predicated region
        $region13: #{tpu_custom_call.1} parent=11 // pred_check
          %p233 = pneg %p66
        $region14: #{tpu_custom_call.1} parent=11 // pred_check_branch
          %235 = sbr.rel (%p233) target = $region16
        $region15: #{tpu_custom_call.1} parent=11 // pred_region
          _
        $region16: #{tpu_custom_call.1} parent=11 // pred_fallthru
          _
        // Predicated region
        $region17: #{tpu_custom_call.1} parent=11 // pred_check
          %p236 = pneg %p87
        $region18: #{tpu_custom_call.1} parent=11 // pred_check_branch
          %238 = sbr.rel (%p236) target = $region20
        $region19: #{tpu_custom_call.1} parent=11 // pred_region
          _
        $region20: #{tpu_custom_call.1} parent=11 // pred_fallthru
          _
        // Predicated region
        $region21: #{tpu_custom_call.1} parent=11 // pred_check
          %p239 = pneg %p108
        $region22: #{tpu_custom_call.1} parent=11 // pred_check_branch
          %241 = sbr.rel (%p239) target = $region24
        $region23: #{tpu_custom_call.1} parent=11 // pred_region
          %s243 = ssub.s32 128, 128
          %244 = vsyncadd [#allocation3], %s243
          %s245 = sshll.u32 [#allocation2], 4
          %s246 = int_to_ptr.vmem [resolvable:$true] %s245
          %251 = dma.hbm_to_vmem [thread:$0]  %s3, 128, %s246, [#allocation3], 64, 64, 4
        $region24: #{tpu_custom_call.1} parent=11 // pred_fallthru
          _
        // Predicated region
        $region25: #{tpu_custom_call.1} parent=11 // pred_check
          %p252 = pneg %p129
        $region26: #{tpu_custom_call.1} parent=11 // pred_check_branch
          %254 = sbr.rel (%p252) target = $region28
        $region27: #{tpu_custom_call.1} parent=11 // pred_region
          %s256 = ssub.s32 256, 256
          %257 = vsyncadd [#allocation6], %s256
          %s258 = sshll.u32 [#allocation5], 4
          %s259 = int_to_ptr.vmem [resolvable:$true] %s258
          %264 = dma.hbm_to_vmem [thread:$0]  %s4, 256, %s259, [#allocation6], 64, 64, 4
        $region28: #{tpu_custom_call.1} parent=11 // pred_fallthru
          _
        // Predicated region
        $region29: #{tpu_custom_call.1} parent=11 // pred_check
          %p265 = pneg %p150
        $region30: #{tpu_custom_call.1} parent=11 // pred_check_branch
          %267 = sbr.rel (%p265) target = $region32
        $region31: #{tpu_custom_call.1} parent=11 // pred_region
          %s269 = ssub.s32 16, 16
          %270 = vsyncadd [#allocation6], %s269
          %s272 = sshll.u32 [#allocation7], 4
          %s273 = int_to_ptr.vmem [resolvable:$true] %s272
          %275 = dma.hbm_to_vmem [thread:$0]  %s5, 16, %s273, [#allocation6]
        $region32: #{tpu_custom_call.1} parent=11 // pred_fallthru
          _
        // Predicated region
        $region33: #{tpu_custom_call.1} parent=11 // pred_check
          %p276 = pneg %p171
        $region34: #{tpu_custom_call.1} parent=11 // pred_check_branch
          %278 = sbr.rel (%p276) target = $region36
        $region35: #{tpu_custom_call.1} parent=11 // pred_region
          _
        $region36: #{tpu_custom_call.1} parent=11 // pred_fallthru
          _
        // Predicated region
        $region37: #{tpu_custom_call.1} parent=11 // pred_check
          %p279 = pneg %p192
        $region38: #{tpu_custom_call.1} parent=11 // pred_check_branch
          %281 = sbr.rel (%p279) target = $region40
        $region39: #{tpu_custom_call.1} parent=11 // pred_region
          _
        $region40: #{tpu_custom_call.1} parent=11 // pred_fallthru
          _
      $region12: #{tpu_custom_call.1} parent=5 // pred_fallthru
        _
      %p282 = scmp.lt.s32.totalorder %s19, 2
      // Predicated region
      $region41: #{tpu_custom_call.1} parent=5 // pred_check
        %p283 = pneg %p282
      $region42: #{tpu_custom_call.1} parent=5 // pred_check_branch
        %285 = sbr.rel (%p283) target = $region44
      $region43: #{tpu_custom_call.1} parent=5 // pred_region
        // Predicated region
        $region45: #{tpu_custom_call.1} parent=43 // pred_check
          %p286 = pneg %p39
        $region46: #{tpu_custom_call.1} parent=43 // pred_check_branch
          %288 = sbr.rel (%p286) target = $region48
        $region47: #{tpu_custom_call.1} parent=43 // pred_region
          %s289 = smul.u32 2, %s19
          %p290 = scmp.lt.s32.totalorder %s289, 3
          %s291 = scalar_select %p290, %s289, 3
          %s292 = smul.addr %s291, 8
          %s293 = scalar_lea.vmem %s0, %s292
          %s294 = smul.u32 2, %s19
        $region48: #{tpu_custom_call.1} parent=43 // pred_fallthru
          _
      $region44: #{tpu_custom_call.1} parent=5 // pred_fallthru
        _
      %p295 = scmp.le.s32.totalorder 1, %s19
      %p296 = scmp.lt.s32.totalorder %s19, 3
      %p297 = pnand %p295, %p296
      %p298 = pneg %p297
      // Predicated region
      $region49: #{tpu_custom_call.1} parent=5 // pred_check
        _
      $region50: #{tpu_custom_call.1} parent=5 // pred_check_branch
        %300 = sbr.rel (%p297) target = $region52
      $region51: #{tpu_custom_call.1} parent=5 // pred_region
        %s301 = ssub.s32 %s19, 1
        // Predicated region
        $region53: #{tpu_custom_call.1} parent=51 // pred_check
          %p302 = pneg %p108
        $region54: #{tpu_custom_call.1} parent=51 // pred_check_branch
          %304 = sbr.rel (%p302) target = $region56
        $region55: #{tpu_custom_call.1} parent=51 // pred_region
          %305 = dma.done [#allocation3], 128
        $region56: #{tpu_custom_call.1} parent=51 // pred_fallthru
          _
        // Predicated region
        $region57: #{tpu_custom_call.1} parent=51 // pred_check
          %p306 = pneg %p129
        $region58: #{tpu_custom_call.1} parent=51 // pred_check_branch
          %308 = sbr.rel (%p306) target = $region60
        $region59: #{tpu_custom_call.1} parent=51 // pred_region
          %309 = dma.done [#allocation6], 256
        $region60: #{tpu_custom_call.1} parent=51 // pred_fallthru
          _
        // Predicated region
        $region61: #{tpu_custom_call.1} parent=51 // pred_check
          %p310 = pneg %p150
        $region62: #{tpu_custom_call.1} parent=51 // pred_check_branch
          %312 = sbr.rel (%p310) target = $region64
        $region63: #{tpu_custom_call.1} parent=51 // pred_region
          %313 = dma.done [#allocation6], 16
        $region64: #{tpu_custom_call.1} parent=51 // pred_fallthru
          _
        %s314 = smul.u32 2, %s24
        %p315 = scmp.lt.s32.totalorder %s314, 3
        %s316 = scalar_select %p315, %s314, 3
        %s317 = smul.addr %s316, 8
        %s318 = scalar_lea.vmem %s0, %s317
        %p319 = pneg %p45
        %p320 = pneg %p42
        %p321 = pneg %p66
        %p322 = pneg %p63
        %p323 = pneg %p87
        %p324 = pneg %p84
        %p325 = pneg %p108
        %p326 = pneg %p105
        %p327 = pneg %p129
        %p328 = pneg %p126
        %p329 = pneg %p150
        %p330 = pneg %p147
        %p331 = pneg %p171
        %p332 = pneg %p168
        %p333 = pneg %p192
        %p334 = pneg %p189
        %p335 = pneg %p218
        %p336 = pneg %p215
        %s337 = sand.u32 %s205, 1
        %s338 = scalar_lea.sflag [#allocation4], %s337
        %s339 = sand.u32 %s205, 1
        %s340 = smul.addr %s339, 16
        %s341 = scalar_lea.vmem [#allocation8], %s340
        %s342 = smul.u32 2, %s24
        %p343 = scmp.lt.s32.totalorder %s342, 3
        %s344 = scalar_select %p343, %s342, 3
        %s345 = smul.addr %s344, 8
        %s346 = scalar_lea.vmem %s0, %s345
        %s347 = smul.u32 2, %s24
        %s348 = smul.u32 2, %s24
        %v350 = vld [vmem:[%s346] sm:$0xff]
        %v351 = vld [vmem:[%s346 + $0x8] sm:$0xff]
        %v352 = vpack.c.bf16 %v351, %v350
        %v353 = vld [vmem:[%s1] sm:$0xf]
        %v354 = vld [vmem:[%s1 + $0x4] sm:$0xf]
        %v355 = vld [vmem:[%s1 + $0x8] sm:$0xf]
        %v356 = vld [vmem:[%s1 + $0xc] sm:$0xf]
        %v357 = vld [vmem:[%s2] sm:$0x1]
        %v359 = vlaneseq
        %v360 = vshrl.u32 %v359, 7
        %v361 = vsub.s32 0, %v360
        %v362 = vrot.slane %v357, %v361
        %v368 = vunpack.c.l.b16 %v353
        %v369 = vunpack.c.l.b16 %v354
        %v370 = vunpack.c.l.b16 %v355
        %v371 = vunpack.c.l.b16 %v356
        %v372 = vpack.c.b16 %v369, %v368
        %v373 = vpack.c.b16 %v371, %v370
        %vm376 = vcmask 261120
        %v378 = vsel %vm376, %v352, 0
        %380 = vmatprep.subr.bf16.mxu0 0
        %381 = vmatpush1.bf16.msra.mxu0 0
        %382 = vmatprep.subr.bf16.mxu0 0
        %383 = vmatpush1.bf16.msra.mxu0 0
        %384 = vmatprep.subr.bf16.mxu0 0
        %385 = vmatpush1.bf16.msra.mxu0 0
        %386 = vmatprep.subr.bf16.mxu0 0
        %387 = vmatpush1.bf16.msra.mxu0 0
        %388 = vmatprep.subr.bf16.mxu0 0
        %389 = vmatpush1.bf16.msra.mxu0 0
        %390 = vmatprep.subr.bf16.mxu0 0
        %391 = vmatpush1.bf16.msra.mxu0 0
        %392 = vmatprep.subr.bf16.mxu0 0
        %393 = vmatpush1.bf16.msra.mxu0 %v373
        %394 = vmatprep.subr.bf16.mxu0 0
        %395 = vmatpush1.bf16.msra.mxu0 %v372
        %396 = vmatprep.subr.bf16.mxu0 0
        %397 = vmatpush2.bf16.msra.mxu0 0
        %398 = vmatprep.subr.bf16.mxu0 0
        %399 = vmatpush2.bf16.msra.mxu0 0
        %400 = vmatprep.subr.bf16.mxu0 0
        %401 = vmatpush2.bf16.msra.mxu0 0
        %402 = vmatprep.subr.bf16.mxu0 0
        %403 = vmatpush2.bf16.msra.mxu0 0
        %404 = vmatprep.subr.bf16.mxu0 0
        %405 = vmatpush2.bf16.msra.mxu0 0
        %406 = vmatprep.subr.bf16.mxu0 0
        %407 = vmatpush2.bf16.msra.mxu0 0
        %408 = vmatprep.subr.bf16.mxu0 0
        %409 = vmatpush2.bf16.msra.mxu0 0
        %410 = vmatprep.subr.bf16.mxu0 0
        %411 = vmatpush2.bf16.msra.mxu0 0
        %412 = vmatprep.mubr.bf16.mxu0 0
        %413 = vmatmul.mubr.bf16.gmra.mxu0 %v378
        %v414 = vpop.f32.mrf.mxu0
        %v415 = vadd.f32 %v362, %v414
        %v416 = vpop.f32.mrf.mxu0
        %v417 = vpop.f32.mrf.mxu0
        %v418 = vadd.f32 %v362, %v417
        %v419 = vpop.f32.mrf.mxu0
        %420 = vdwg.mxu0
        %422 = vrot.lane.b32.xlu0 %v415, 112
        %v423 = vpop.permute.xlu0 %422
        %vm424 = vcmask 64512
        %v425 = vsel %vm424, %v415, 0
        %v427 = vsel %vm424, %v423, 0
        %429 = vmatprep.subr.mxu0 0.0
        %430 = vmatpush1.xpose.msra.mxu0 0.0
        %431 = vmatprep.subr.mxu0 0.0
        %432 = vmatpush1.xpose.msra.mxu0 0.0
        %433 = vmatprep.subr.mxu0 0.0
        %434 = vmatpush1.xpose.msra.mxu0 0.0
        %435 = vmatprep.subr.mxu0 0.0
        %436 = vmatpush1.xpose.msra.mxu0 0.0
        %437 = vmatprep.subr.mxu0 0.0
        %438 = vmatpush1.xpose.msra.mxu0 0.0
        %439 = vmatprep.subr.mxu0 0.0
        %440 = vmatpush1.xpose.msra.mxu0 0.0
        %441 = vmatprep.subr.mxu0 0.0
        %442 = vmatpush1.xpose.msra.mxu0 0.0
        %443 = vmatprep.subr.mxu0 0.0
        %444 = vmatpush1.xpose.msra.mxu0 0.0
        %445 = vmatprep.subr.mxu0 0.0
        %446 = vmatpush1.xpose.msra.mxu0 0.0
        %447 = vmatprep.subr.mxu0 0.0
        %448 = vmatpush1.xpose.msra.mxu0 0.0
        %449 = vmatprep.subr.mxu0 0.0
        %450 = vmatpush1.xpose.msra.mxu0 0.0
        %451 = vmatprep.subr.mxu0 0.0
        %452 = vmatpush1.xpose.msra.mxu0 0.0
        %453 = vmatprep.subr.mxu0 0.0
        %454 = vmatpush1.xpose.msra.mxu0 0.0
        %455 = vmatprep.subr.mxu0 0.0
        %456 = vmatpush1.xpose.msra.mxu0 0.0
        %457 = vmatprep.subr.mxu0 0.0
        %458 = vmatpush1.xpose.msra.mxu0 0.0
        %459 = vmatprep.subr.mxu0 0.0
        %460 = vmatpush1.xpose.msra.mxu0 %v427
        %461 = vmatprep.subr.mxu0 0.0
        %462 = vmatpush2.xpose.msra.mxu0 0.0
        %463 = vmatprep.subr.mxu0 0.0
        %464 = vmatpush2.xpose.msra.mxu0 0.0
        %465 = vmatprep.subr.mxu0 0.0
        %466 = vmatpush2.xpose.msra.mxu0 0.0
        %467 = vmatprep.subr.mxu0 0.0
        %468 = vmatpush2.xpose.msra.mxu0 0.0
        %469 = vmatprep.subr.mxu0 0.0
        %470 = vmatpush2.xpose.msra.mxu0 0.0
        %471 = vmatprep.subr.mxu0 0.0
        %472 = vmatpush2.xpose.msra.mxu0 0.0
        %473 = vmatprep.subr.mxu0 0.0
        %474 = vmatpush2.xpose.msra.mxu0 0.0
        %475 = vmatprep.subr.mxu0 0.0
        %476 = vmatpush2.xpose.msra.mxu0 0.0
        %477 = vmatprep.subr.mxu0 0.0
        %478 = vmatpush2.xpose.msra.mxu0 0.0
        %479 = vmatprep.subr.mxu0 0.0
        %480 = vmatpush2.xpose.msra.mxu0 0.0
        %481 = vmatprep.subr.mxu0 0.0
        %482 = vmatpush2.xpose.msra.mxu0 0.0
        %483 = vmatprep.subr.mxu0 0.0
        %484 = vmatpush2.xpose.msra.mxu0 0.0
        %485 = vmatprep.subr.mxu0 0.0
        %486 = vmatpush2.xpose.msra.mxu0 0.0
        %487 = vmatprep.subr.mxu0 0.0
        %488 = vmatpush2.xpose.msra.mxu0 0.0
        %489 = vmatprep.subr.mxu0 0.0
        %490 = vmatpush2.xpose.msra.mxu0 0.0
        %491 = vmatprep.subr.mxu0 0.0
        %492 = vmatpush2.xpose.msra.mxu0 0.0
        %493 = vmatprep.mubr.f32.mxu0 0.0
        %494 = vmatmul.mubr.f32.gmra.mxu0 %v425
        %v495 = vpop.f32.mrf.mxu0
        %v496 = vadd.f32 0.0, %v495
        %v497 = vpop.f32.mrf.mxu0
        %498 = vdwg.mxu0
        %500 = vrot.lane.b32.xlu0 %v418, 112
        %v501 = vpop.permute.xlu0 %500
        %v502 = vsel %vm424, %v418, 0
        %v504 = vsel %vm424, %v501, 0
        %506 = vmatprep.subr.mxu0 0.0
        %507 = vmatpush1.xpose.msra.mxu0 0.0
        %508 = vmatprep.subr.mxu0 0.0
        %509 = vmatpush1.xpose.msra.mxu0 0.0
        %510 = vmatprep.subr.mxu0 0.0
        %511 = vmatpush1.xpose.msra.mxu0 0.0
        %512 = vmatprep.subr.mxu0 0.0
        %513 = vmatpush1.xpose.msra.mxu0 0.0
        %514 = vmatprep.subr.mxu0 0.0
        %515 = vmatpush1.xpose.msra.mxu0 0.0
        %516 = vmatprep.subr.mxu0 0.0
        %517 = vmatpush1.xpose.msra.mxu0 0.0
        %518 = vmatprep.subr.mxu0 0.0
        %519 = vmatpush1.xpose.msra.mxu0 0.0
        %520 = vmatprep.subr.mxu0 0.0
        %521 = vmatpush1.xpose.msra.mxu0 0.0
        %522 = vmatprep.subr.mxu0 0.0
        %523 = vmatpush1.xpose.msra.mxu0 0.0
        %524 = vmatprep.subr.mxu0 0.0
        %525 = vmatpush1.xpose.msra.mxu0 0.0
        %526 = vmatprep.subr.mxu0 0.0
        %527 = vmatpush1.xpose.msra.mxu0 0.0
        %528 = vmatprep.subr.mxu0 0.0
        %529 = vmatpush1.xpose.msra.mxu0 0.0
        %530 = vmatprep.subr.mxu0 0.0
        %531 = vmatpush1.xpose.msra.mxu0 0.0
        %532 = vmatprep.subr.mxu0 0.0
        %533 = vmatpush1.xpose.msra.mxu0 0.0
        %534 = vmatprep.subr.mxu0 0.0
        %535 = vmatpush1.xpose.msra.mxu0 0.0
        %536 = vmatprep.subr.mxu0 0.0
        %537 = vmatpush1.xpose.msra.mxu0 %v504
        %538 = vmatprep.subr.mxu0 0.0
        %539 = vmatpush2.xpose.msra.mxu0 0.0
        %540 = vmatprep.subr.mxu0 0.0
        %541 = vmatpush2.xpose.msra.mxu0 0.0
        %542 = vmatprep.subr.mxu0 0.0
        %543 = vmatpush2.xpose.msra.mxu0 0.0
        %544 = vmatprep.subr.mxu0 0.0
        %545 = vmatpush2.xpose.msra.mxu0 0.0
        %546 = vmatprep.subr.mxu0 0.0
        %547 = vmatpush2.xpose.msra.mxu0 0.0
        %548 = vmatprep.subr.mxu0 0.0
        %549 = vmatpush2.xpose.msra.mxu0 0.0
        %550 = vmatprep.subr.mxu0 0.0
        %551 = vmatpush2.xpose.msra.mxu0 0.0
        %552 = vmatprep.subr.mxu0 0.0
        %553 = vmatpush2.xpose.msra.mxu0 0.0
        %554 = vmatprep.subr.mxu0 0.0
        %555 = vmatpush2.xpose.msra.mxu0 0.0
        %556 = vmatprep.subr.mxu0 0.0
        %557 = vmatpush2.xpose.msra.mxu0 0.0
        %558 = vmatprep.subr.mxu0 0.0
        %559 = vmatpush2.xpose.msra.mxu0 0.0
        %560 = vmatprep.subr.mxu0 0.0
        %561 = vmatpush2.xpose.msra.mxu0 0.0
        %562 = vmatprep.subr.mxu0 0.0
        %563 = vmatpush2.xpose.msra.mxu0 0.0
        %564 = vmatprep.subr.mxu0 0.0
        %565 = vmatpush2.xpose.msra.mxu0 0.0
        %566 = vmatprep.subr.mxu0 0.0
        %567 = vmatpush2.xpose.msra.mxu0 0.0
        %568 = vmatprep.subr.mxu0 0.0
        %569 = vmatpush2.xpose.msra.mxu0 0.0
        %570 = vmatprep.mubr.f32.mxu0 0.0
        %571 = vmatmul.mubr.f32.gmra.mxu0 %v502
        %v572 = vpop.f32.mrf.mxu0
        %v573 = vadd.f32 0.0, %v572
        %v574 = vpop.f32.mrf.mxu0
        %575 = vdwg.mxu0
        %v576 = vsel %vm424, %v496, -inf
        %577 = vmax.xlane.f32.xlu0 %v576
        %v578 = vpop.xlane.xlu0 %577
        %v579 = vsel %vm424, %v573, -inf
        %580 = vmax.xlane.f32.xlu0 %v579
        %v581 = vpop.xlane.xlu0 %580
        %v582 = vsub.f32 %v496, %v578
        %v583 = vsub.f32 %v573, %v581
        %v584 = vmul.f32 %v582, 1.442695
        %v585 = vpow.pop %v584
        %v586 = vmul.f32 %v583, 1.442695
        %v587 = vpow.pop %v586
        %v588 = vsel %vm424, %v585, 0.0
        %589 = vadd.xlane.f32.xlu0 %v588
        %v590 = vpop.xlane.xlu0 %589
        %v591 = vsel %vm424, %v587, 0.0
        %592 = vadd.xlane.f32.xlu0 %v591
        %v593 = vpop.xlane.xlu0 %592
        %v594 = vrcp.pop %v590
        %v595 = vrcp.pop %v593
        %v596 = vmul.f32 %v585, %v594
        %v597 = vmul.f32 %v587, %v595
        %598 = vrot.lane.b32.xlu0 %v415, 96
        %v599 = vpop.permute.xlu0 %598
        %v602 = vsel %vm424, %v596, 0
        %604 = vmatprep.subr.mxu0 0.0
        %605 = vmatpush1.msra.mxu0 0.0
        %606 = vmatprep.subr.mxu0 0.0
        %607 = vmatpush1.msra.mxu0 0.0
        %608 = vmatprep.subr.mxu0 0.0
        %609 = vmatpush1.msra.mxu0 0.0
        %610 = vmatprep.subr.mxu0 0.0
        %611 = vmatpush1.msra.mxu0 0.0
        %612 = vmatprep.subr.mxu0 0.0
        %613 = vmatpush1.msra.mxu0 0.0
        %614 = vmatprep.subr.mxu0 0.0
        %615 = vmatpush1.msra.mxu0 0.0
        %616 = vmatprep.subr.mxu0 0.0
        %617 = vmatpush1.msra.mxu0 0.0
        %618 = vmatprep.subr.mxu0 0.0
        %619 = vmatpush1.msra.mxu0 0.0
        %620 = vmatprep.subr.mxu0 0.0
        %621 = vmatpush1.msra.mxu0 0.0
        %622 = vmatprep.subr.mxu0 0.0
        %623 = vmatpush1.msra.mxu0 0.0
        %624 = vmatprep.subr.mxu0 0.0
        %625 = vmatpush1.msra.mxu0 0.0
        %626 = vmatprep.subr.mxu0 0.0
        %627 = vmatpush1.msra.mxu0 0.0
        %628 = vmatprep.subr.mxu0 0.0
        %629 = vmatpush1.msra.mxu0 0.0
        %630 = vmatprep.subr.mxu0 0.0
        %631 = vmatpush1.msra.mxu0 0.0
        %632 = vmatprep.subr.mxu0 0.0
        %633 = vmatpush1.msra.mxu0 0.0
        %634 = vmatprep.subr.mxu0 0.0
        %635 = vmatpush1.msra.mxu0 %v599
        %636 = vmatprep.subr.mxu0 0.0
        %637 = vmatpush2.msra.mxu0 0.0
        %638 = vmatprep.subr.mxu0 0.0
        %639 = vmatpush2.msra.mxu0 0.0
        %640 = vmatprep.subr.mxu0 0.0
        %641 = vmatpush2.msra.mxu0 0.0
        %642 = vmatprep.subr.mxu0 0.0
        %643 = vmatpush2.msra.mxu0 0.0
        %644 = vmatprep.subr.mxu0 0.0
        %645 = vmatpush2.msra.mxu0 0.0
        %646 = vmatprep.subr.mxu0 0.0
        %647 = vmatpush2.msra.mxu0 0.0
        %648 = vmatprep.subr.mxu0 0.0
        %649 = vmatpush2.msra.mxu0 0.0
        %650 = vmatprep.subr.mxu0 0.0
        %651 = vmatpush2.msra.mxu0 0.0
        %652 = vmatprep.subr.mxu0 0.0
        %653 = vmatpush2.msra.mxu0 0.0
        %654 = vmatprep.subr.mxu0 0.0
        %655 = vmatpush2.msra.mxu0 0.0
        %656 = vmatprep.subr.mxu0 0.0
        %657 = vmatpush2.msra.mxu0 0.0
        %658 = vmatprep.subr.mxu0 0.0
        %659 = vmatpush2.msra.mxu0 0.0
        %660 = vmatprep.subr.mxu0 0.0
        %661 = vmatpush2.msra.mxu0 0.0
        %662 = vmatprep.subr.mxu0 0.0
        %663 = vmatpush2.msra.mxu0 0.0
        %664 = vmatprep.subr.mxu0 0.0
        %665 = vmatpush2.msra.mxu0 0.0
        %666 = vmatprep.subr.mxu0 0.0
        %667 = vmatpush2.msra.mxu0 0.0
        %668 = vmatprep.mubr.f32.mxu0 0.0
        %669 = vmatmul.mubr.f32.gmra.mxu0 %v602
        %v670 = vpop.f32.mrf.mxu0
        %v671 = vadd.f32 0.0, %v670
        %v672 = vpop.f32.mrf.mxu0
        %673 = vdwg.mxu0
        %674 = vrot.lane.b32.xlu0 %v418, 96
        %v675 = vpop.permute.xlu0 %674
        %v678 = vsel %vm424, %v597, 0
        %680 = vmatprep.subr.mxu0 0.0
        %681 = vmatpush1.msra.mxu0 0.0
        %682 = vmatprep.subr.mxu0 0.0
        %683 = vmatpush1.msra.mxu0 0.0
        %684 = vmatprep.subr.mxu0 0.0
        %685 = vmatpush1.msra.mxu0 0.0
        %686 = vmatprep.subr.mxu0 0.0
        %687 = vmatpush1.msra.mxu0 0.0
        %688 = vmatprep.subr.mxu0 0.0
        %689 = vmatpush1.msra.mxu0 0.0
        %690 = vmatprep.subr.mxu0 0.0
        %691 = vmatpush1.msra.mxu0 0.0
        %692 = vmatprep.subr.mxu0 0.0
        %693 = vmatpush1.msra.mxu0 0.0
        %694 = vmatprep.subr.mxu0 0.0
        %695 = vmatpush1.msra.mxu0 0.0
        %696 = vmatprep.subr.mxu0 0.0
        %697 = vmatpush1.msra.mxu0 0.0
        %698 = vmatprep.subr.mxu0 0.0
        %699 = vmatpush1.msra.mxu0 0.0
        %700 = vmatprep.subr.mxu0 0.0
        %701 = vmatpush1.msra.mxu0 0.0
        %702 = vmatprep.subr.mxu0 0.0
        %703 = vmatpush1.msra.mxu0 0.0
        %704 = vmatprep.subr.mxu0 0.0
        %705 = vmatpush1.msra.mxu0 0.0
        %706 = vmatprep.subr.mxu0 0.0
        %707 = vmatpush1.msra.mxu0 0.0
        %708 = vmatprep.subr.mxu0 0.0
        %709 = vmatpush1.msra.mxu0 0.0
        %710 = vmatprep.subr.mxu0 0.0
        %711 = vmatpush1.msra.mxu0 %v675
        %712 = vmatprep.subr.mxu0 0.0
        %713 = vmatpush2.msra.mxu0 0.0
        %714 = vmatprep.subr.mxu0 0.0
        %715 = vmatpush2.msra.mxu0 0.0
        %716 = vmatprep.subr.mxu0 0.0
        %717 = vmatpush2.msra.mxu0 0.0
        %718 = vmatprep.subr.mxu0 0.0
        %719 = vmatpush2.msra.mxu0 0.0
        %720 = vmatprep.subr.mxu0 0.0
        %721 = vmatpush2.msra.mxu0 0.0
        %722 = vmatprep.subr.mxu0 0.0
        %723 = vmatpush2.msra.mxu0 0.0
        %724 = vmatprep.subr.mxu0 0.0
        %725 = vmatpush2.msra.mxu0 0.0
        %726 = vmatprep.subr.mxu0 0.0
        %727 = vmatpush2.msra.mxu0 0.0
        %728 = vmatprep.subr.mxu0 0.0
        %729 = vmatpush2.msra.mxu0 0.0
        %730 = vmatprep.subr.mxu0 0.0
        %731 = vmatpush2.msra.mxu0 0.0
        %732 = vmatprep.subr.mxu0 0.0
        %733 = vmatpush2.msra.mxu0 0.0
        %734 = vmatprep.subr.mxu0 0.0
        %735 = vmatpush2.msra.mxu0 0.0
        %736 = vmatprep.subr.mxu0 0.0
        %737 = vmatpush2.msra.mxu0 0.0
        %738 = vmatprep.subr.mxu0 0.0
        %739 = vmatpush2.msra.mxu0 0.0
        %740 = vmatprep.subr.mxu0 0.0
        %741 = vmatpush2.msra.mxu0 0.0
        %742 = vmatprep.subr.mxu0 0.0
        %743 = vmatpush2.msra.mxu0 0.0
        %744 = vmatprep.mubr.f32.mxu0 0.0
        %745 = vmatmul.mubr.f32.gmra.mxu0 %v678
        %v746 = vpop.f32.mrf.mxu0
        %v747 = vadd.f32 0.0, %v746
        %v748 = vpop.f32.mrf.mxu0
        %749 = vdwg.mxu0
        %750 = vrot.lane.b32.xlu0 %v415, 120
        %v751 = vpop.permute.xlu0 %750
        %752 = vrot.lane.b32.xlu0 %v415, 104
        %v753 = vpop.permute.xlu0 %752
        %v754 = vsel %vm424, %v751, 0
        %v756 = vsel %vm424, %v753, 0
        %758 = vmatprep.subr.mxu0 0.0
        %759 = vmatpush1.xpose.msra.mxu0 0.0
        %760 = vmatprep.subr.mxu0 0.0
        %761 = vmatpush1.xpose.msra.mxu0 0.0
        %762 = vmatprep.subr.mxu0 0.0
        %763 = vmatpush1.xpose.msra.mxu0 0.0
        %764 = vmatprep.subr.mxu0 0.0
        %765 = vmatpush1.xpose.msra.mxu0 0.0
        %766 = vmatprep.subr.mxu0 0.0
        %767 = vmatpush1.xpose.msra.mxu0 0.0
        %768 = vmatprep.subr.mxu0 0.0
        %769 = vmatpush1.xpose.msra.mxu0 0.0
        %770 = vmatprep.subr.mxu0 0.0
        %771 = vmatpush1.xpose.msra.mxu0 0.0
        %772 = vmatprep.subr.mxu0 0.0
        %773 = vmatpush1.xpose.msra.mxu0 0.0
        %774 = vmatprep.subr.mxu0 0.0
        %775 = vmatpush1.xpose.msra.mxu0 0.0
        %776 = vmatprep.subr.mxu0 0.0
        %777 = vmatpush1.xpose.msra.mxu0 0.0
        %778 = vmatprep.subr.mxu0 0.0
        %779 = vmatpush1.xpose.msra.mxu0 0.0
        %780 = vmatprep.subr.mxu0 0.0
        %781 = vmatpush1.xpose.msra.mxu0 0.0
        %782 = vmatprep.subr.mxu0 0.0
        %783 = vmatpush1.xpose.msra.mxu0 0.0
        %784 = vmatprep.subr.mxu0 0.0
        %785 = vmatpush1.xpose.msra.mxu0 0.0
        %786 = vmatprep.subr.mxu0 0.0
        %787 = vmatpush1.xpose.msra.mxu0 0.0
        %788 = vmatprep.subr.mxu0 0.0
        %789 = vmatpush1.xpose.msra.mxu0 %v756
        %790 = vmatprep.subr.mxu0 0.0
        %791 = vmatpush2.xpose.msra.mxu0 0.0
        %792 = vmatprep.subr.mxu0 0.0
        %793 = vmatpush2.xpose.msra.mxu0 0.0
        %794 = vmatprep.subr.mxu0 0.0
        %795 = vmatpush2.xpose.msra.mxu0 0.0
        %796 = vmatprep.subr.mxu0 0.0
        %797 = vmatpush2.xpose.msra.mxu0 0.0
        %798 = vmatprep.subr.mxu0 0.0
        %799 = vmatpush2.xpose.msra.mxu0 0.0
        %800 = vmatprep.subr.mxu0 0.0
        %801 = vmatpush2.xpose.msra.mxu0 0.0
        %802 = vmatprep.subr.mxu0 0.0
        %803 = vmatpush2.xpose.msra.mxu0 0.0
        %804 = vmatprep.subr.mxu0 0.0
        %805 = vmatpush2.xpose.msra.mxu0 0.0
        %806 = vmatprep.subr.mxu0 0.0
        %807 = vmatpush2.xpose.msra.mxu0 0.0
        %808 = vmatprep.subr.mxu0 0.0
        %809 = vmatpush2.xpose.msra.mxu0 0.0
        %810 = vmatprep.subr.mxu0 0.0
        %811 = vmatpush2.xpose.msra.mxu0 0.0
        %812 = vmatprep.subr.mxu0 0.0
        %813 = vmatpush2.xpose.msra.mxu0 0.0
        %814 = vmatprep.subr.mxu0 0.0
        %815 = vmatpush2.xpose.msra.mxu0 0.0
        %816 = vmatprep.subr.mxu0 0.0
        %817 = vmatpush2.xpose.msra.mxu0 0.0
        %818 = vmatprep.subr.mxu0 0.0
        %819 = vmatpush2.xpose.msra.mxu0 0.0
        %820 = vmatprep.subr.mxu0 0.0
        %821 = vmatpush2.xpose.msra.mxu0 0.0
        %822 = vmatprep.mubr.f32.mxu0 0.0
        %823 = vmatmul.mubr.f32.gmra.mxu0 %v754
        %v824 = vpop.f32.mrf.mxu0
        %v825 = vadd.f32 0.0, %v824
        %v826 = vpop.f32.mrf.mxu0
        %827 = vdwg.mxu0
        %828 = vrot.lane.b32.xlu0 %v418, 120
        %v829 = vpop.permute.xlu0 %828
        %830 = vrot.lane.b32.xlu0 %v418, 104
        %v831 = vpop.permute.xlu0 %830
        %v832 = vsel %vm424, %v829, 0
        %v834 = vsel %vm424, %v831, 0
        %836 = vmatprep.subr.mxu0 0.0
        %837 = vmatpush1.xpose.msra.mxu0 0.0
        %838 = vmatprep.subr.mxu0 0.0
        %839 = vmatpush1.xpose.msra.mxu0 0.0
        %840 = vmatprep.subr.mxu0 0.0
        %841 = vmatpush1.xpose.msra.mxu0 0.0
        %842 = vmatprep.subr.mxu0 0.0
        %843 = vmatpush1.xpose.msra.mxu0 0.0
        %844 = vmatprep.subr.mxu0 0.0
        %845 = vmatpush1.xpose.msra.mxu0 0.0
        %846 = vmatprep.subr.mxu0 0.0
        %847 = vmatpush1.xpose.msra.mxu0 0.0
        %848 = vmatprep.subr.mxu0 0.0
        %849 = vmatpush1.xpose.msra.mxu0 0.0
        %850 = vmatprep.subr.mxu0 0.0
        %851 = vmatpush1.xpose.msra.mxu0 0.0
        %852 = vmatprep.subr.mxu0 0.0
        %853 = vmatpush1.xpose.msra.mxu0 0.0
        %854 = vmatprep.subr.mxu0 0.0
        %855 = vmatpush1.xpose.msra.mxu0 0.0
        %856 = vmatprep.subr.mxu0 0.0
        %857 = vmatpush1.xpose.msra.mxu0 0.0
        %858 = vmatprep.subr.mxu0 0.0
        %859 = vmatpush1.xpose.msra.mxu0 0.0
        %860 = vmatprep.subr.mxu0 0.0
        %861 = vmatpush1.xpose.msra.mxu0 0.0
        %862 = vmatprep.subr.mxu0 0.0
        %863 = vmatpush1.xpose.msra.mxu0 0.0
        %864 = vmatprep.subr.mxu0 0.0
        %865 = vmatpush1.xpose.msra.mxu0 0.0
        %866 = vmatprep.subr.mxu0 0.0
        %867 = vmatpush1.xpose.msra.mxu0 %v834
        %868 = vmatprep.subr.mxu0 0.0
        %869 = vmatpush2.xpose.msra.mxu0 0.0
        %870 = vmatprep.subr.mxu0 0.0
        %871 = vmatpush2.xpose.msra.mxu0 0.0
        %872 = vmatprep.subr.mxu0 0.0
        %873 = vmatpush2.xpose.msra.mxu0 0.0
        %874 = vmatprep.subr.mxu0 0.0
        %875 = vmatpush2.xpose.msra.mxu0 0.0
        %876 = vmatprep.subr.mxu0 0.0
        %877 = vmatpush2.xpose.msra.mxu0 0.0
        %878 = vmatprep.subr.mxu0 0.0
        %879 = vmatpush2.xpose.msra.mxu0 0.0
        %880 = vmatprep.subr.mxu0 0.0
        %881 = vmatpush2.xpose.msra.mxu0 0.0
        %882 = vmatprep.subr.mxu0 0.0
        %883 = vmatpush2.xpose.msra.mxu0 0.0
        %884 = vmatprep.subr.mxu0 0.0
        %885 = vmatpush2.xpose.msra.mxu0 0.0
        %886 = vmatprep.subr.mxu0 0.0
        %887 = vmatpush2.xpose.msra.mxu0 0.0
        %888 = vmatprep.subr.mxu0 0.0
        %889 = vmatpush2.xpose.msra.mxu0 0.0
        %890 = vmatprep.subr.mxu0 0.0
        %891 = vmatpush2.xpose.msra.mxu0 0.0
        %892 = vmatprep.subr.mxu0 0.0
        %893 = vmatpush2.xpose.msra.mxu0 0.0
        %894 = vmatprep.subr.mxu0 0.0
        %895 = vmatpush2.xpose.msra.mxu0 0.0
        %896 = vmatprep.subr.mxu0 0.0
        %897 = vmatpush2.xpose.msra.mxu0 0.0
        %898 = vmatprep.subr.mxu0 0.0
        %899 = vmatpush2.xpose.msra.mxu0 0.0
        %900 = vmatprep.mubr.f32.mxu0 0.0
        %901 = vmatmul.mubr.f32.gmra.mxu0 %v832
        %v902 = vpop.f32.mrf.mxu0
        %v903 = vadd.f32 0.0, %v902
        %v904 = vpop.f32.mrf.mxu0
        %905 = vdwg.mxu0
        %v906 = vsel %vm424, %v825, -inf
        %907 = vmax.xlane.f32.xlu0 %v906
        %v908 = vpop.xlane.xlu0 %907
        %v909 = vsel %vm424, %v903, -inf
        %910 = vmax.xlane.f32.xlu0 %v909
        %v911 = vpop.xlane.xlu0 %910
        %v912 = vsub.f32 %v825, %v908
        %v913 = vsub.f32 %v903, %v911
        %v914 = vmul.f32 %v912, 1.442695
        %v915 = vpow.pop %v914
        %v916 = vmul.f32 %v913, 1.442695
        %v917 = vpow.pop %v916
        %v918 = vsel %vm424, %v915, 0.0
        %919 = vadd.xlane.f32.xlu0 %v918
        %v920 = vpop.xlane.xlu0 %919
        %v921 = vsel %vm424, %v917, 0.0
        %922 = vadd.xlane.f32.xlu0 %v921
        %v923 = vpop.xlane.xlu0 %922
        %v924 = vrcp.pop %v920
        %v925 = vrcp.pop %v923
        %v926 = vmul.f32 %v915, %v924
        %v927 = vmul.f32 %v917, %v925
        %928 = vrot.lane.b32.xlu0 %v415, 88
        %v929 = vpop.permute.xlu0 %928
        %v932 = vsel %vm424, %v926, 0
        %934 = vmatprep.subr.mxu0 0.0
        %935 = vmatpush1.msra.mxu0 0.0
        %936 = vmatprep.subr.mxu0 0.0
        %937 = vmatpush1.msra.mxu0 0.0
        %938 = vmatprep.subr.mxu0 0.0
        %939 = vmatpush1.msra.mxu0 0.0
        %940 = vmatprep.subr.mxu0 0.0
        %941 = vmatpush1.msra.mxu0 0.0
        %942 = vmatprep.subr.mxu0 0.0
        %943 = vmatpush1.msra.mxu0 0.0
        %944 = vmatprep.subr.mxu0 0.0
        %945 = vmatpush1.msra.mxu0 0.0
        %946 = vmatprep.subr.mxu0 0.0
        %947 = vmatpush1.msra.mxu0 0.0
        %948 = vmatprep.subr.mxu0 0.0
        %949 = vmatpush1.msra.mxu0 0.0
        %950 = vmatprep.subr.mxu0 0.0
        %951 = vmatpush1.msra.mxu0 0.0
        %952 = vmatprep.subr.mxu0 0.0
        %953 = vmatpush1.msra.mxu0 0.0
        %954 = vmatprep.subr.mxu0 0.0
        %955 = vmatpush1.msra.mxu0 0.0
        %956 = vmatprep.subr.mxu0 0.0
        %957 = vmatpush1.msra.mxu0 0.0
        %958 = vmatprep.subr.mxu0 0.0
        %959 = vmatpush1.msra.mxu0 0.0
        %960 = vmatprep.subr.mxu0 0.0
        %961 = vmatpush1.msra.mxu0 0.0
        %962 = vmatprep.subr.mxu0 0.0
        %963 = vmatpush1.msra.mxu0 0.0
        %964 = vmatprep.subr.mxu0 0.0
        %965 = vmatpush1.msra.mxu0 %v929
        %966 = vmatprep.subr.mxu0 0.0
        %967 = vmatpush2.msra.mxu0 0.0
        %968 = vmatprep.subr.mxu0 0.0
        %969 = vmatpush2.msra.mxu0 0.0
        %970 = vmatprep.subr.mxu0 0.0
        %971 = vmatpush2.msra.mxu0 0.0
        %972 = vmatprep.subr.mxu0 0.0
        %973 = vmatpush2.msra.mxu0 0.0
        %974 = vmatprep.subr.mxu0 0.0
        %975 = vmatpush2.msra.mxu0 0.0
        %976 = vmatprep.subr.mxu0 0.0
        %977 = vmatpush2.msra.mxu0 0.0
        %978 = vmatprep.subr.mxu0 0.0
        %979 = vmatpush2.msra.mxu0 0.0
        %980 = vmatprep.subr.mxu0 0.0
        %981 = vmatpush2.msra.mxu0 0.0
        %982 = vmatprep.subr.mxu0 0.0
        %983 = vmatpush2.msra.mxu0 0.0
        %984 = vmatprep.subr.mxu0 0.0
        %985 = vmatpush2.msra.mxu0 0.0
        %986 = vmatprep.subr.mxu0 0.0
        %987 = vmatpush2.msra.mxu0 0.0
        %988 = vmatprep.subr.mxu0 0.0
        %989 = vmatpush2.msra.mxu0 0.0
        %990 = vmatprep.subr.mxu0 0.0
        %991 = vmatpush2.msra.mxu0 0.0
        %992 = vmatprep.subr.mxu0 0.0
        %993 = vmatpush2.msra.mxu0 0.0
        %994 = vmatprep.subr.mxu0 0.0
        %995 = vmatpush2.msra.mxu0 0.0
        %996 = vmatprep.subr.mxu0 0.0
        %997 = vmatpush2.msra.mxu0 0.0
        %998 = vmatprep.mubr.f32.mxu0 0.0
        %999 = vmatmul.mubr.f32.gmra.mxu0 %v932
        %v1000 = vpop.f32.mrf.mxu0
        %v1001 = vadd.f32 0.0, %v1000
        %v1002 = vpop.f32.mrf.mxu0
        %1003 = vdwg.mxu0
        %1004 = vrot.lane.b32.xlu0 %v418, 88
        %v1005 = vpop.permute.xlu0 %1004
        %v1008 = vsel %vm424, %v927, 0
        %1010 = vmatprep.subr.mxu0 0.0
        %1011 = vmatpush1.msra.mxu0 0.0
        %1012 = vmatprep.subr.mxu0 0.0
        %1013 = vmatpush1.msra.mxu0 0.0
        %1014 = vmatprep.subr.mxu0 0.0
        %1015 = vmatpush1.msra.mxu0 0.0
        %1016 = vmatprep.subr.mxu0 0.0
        %1017 = vmatpush1.msra.mxu0 0.0
        %1018 = vmatprep.subr.mxu0 0.0
        %1019 = vmatpush1.msra.mxu0 0.0
        %1020 = vmatprep.subr.mxu0 0.0
        %1021 = vmatpush1.msra.mxu0 0.0
        %1022 = vmatprep.subr.mxu0 0.0
        %1023 = vmatpush1.msra.mxu0 0.0
        %1024 = vmatprep.subr.mxu0 0.0
        %1025 = vmatpush1.msra.mxu0 0.0
        %1026 = vmatprep.subr.mxu0 0.0
        %1027 = vmatpush1.msra.mxu0 0.0
        %1028 = vmatprep.subr.mxu0 0.0
        %1029 = vmatpush1.msra.mxu0 0.0
        %1030 = vmatprep.subr.mxu0 0.0
        %1031 = vmatpush1.msra.mxu0 0.0
        %1032 = vmatprep.subr.mxu0 0.0
        %1033 = vmatpush1.msra.mxu0 0.0
        %1034 = vmatprep.subr.mxu0 0.0
        %1035 = vmatpush1.msra.mxu0 0.0
        %1036 = vmatprep.subr.mxu0 0.0
        %1037 = vmatpush1.msra.mxu0 0.0
        %1038 = vmatprep.subr.mxu0 0.0
        %1039 = vmatpush1.msra.mxu0 0.0
        %1040 = vmatprep.subr.mxu0 0.0
        %1041 = vmatpush1.msra.mxu0 %v1005
        %1042 = vmatprep.subr.mxu0 0.0
        %1043 = vmatpush2.msra.mxu0 0.0
        %1044 = vmatprep.subr.mxu0 0.0
        %1045 = vmatpush2.msra.mxu0 0.0
        %1046 = vmatprep.subr.mxu0 0.0
        %1047 = vmatpush2.msra.mxu0 0.0
        %1048 = vmatprep.subr.mxu0 0.0
        %1049 = vmatpush2.msra.mxu0 0.0
        %1050 = vmatprep.subr.mxu0 0.0
        %1051 = vmatpush2.msra.mxu0 0.0
        %1052 = vmatprep.subr.mxu0 0.0
        %1053 = vmatpush2.msra.mxu0 0.0
        %1054 = vmatprep.subr.mxu0 0.0
        %1055 = vmatpush2.msra.mxu0 0.0
        %1056 = vmatprep.subr.mxu0 0.0
        %1057 = vmatpush2.msra.mxu0 0.0
        %1058 = vmatprep.subr.mxu0 0.0
        %1059 = vmatpush2.msra.mxu0 0.0
        %1060 = vmatprep.subr.mxu0 0.0
        %1061 = vmatpush2.msra.mxu0 0.0
        %1062 = vmatprep.subr.mxu0 0.0
        %1063 = vmatpush2.msra.mxu0 0.0
        %1064 = vmatprep.subr.mxu0 0.0
        %1065 = vmatpush2.msra.mxu0 0.0
        %1066 = vmatprep.subr.mxu0 0.0
        %1067 = vmatpush2.msra.mxu0 0.0
        %1068 = vmatprep.subr.mxu0 0.0
        %1069 = vmatpush2.msra.mxu0 0.0
        %1070 = vmatprep.subr.mxu0 0.0
        %1071 = vmatpush2.msra.mxu0 0.0
        %1072 = vmatprep.subr.mxu0 0.0
        %1073 = vmatpush2.msra.mxu0 0.0
        %1074 = vmatprep.mubr.f32.mxu0 0.0
        %1075 = vmatmul.mubr.f32.gmra.mxu0 %v1008
        %v1076 = vpop.f32.mrf.mxu0
        %v1077 = vadd.f32 0.0, %v1076
        %v1078 = vpop.f32.mrf.mxu0
        %1079 = vdwg.mxu0
        %1082 = vrot.lane.b32.xlu0 %v1001, 8
        %v1083 = vpop.permute.xlu0 %1082
        %1084 = vrot.lane.b32.xlu0 %v1077, 8
        %v1085 = vpop.permute.xlu0 %1084
        %v1088 = vsel %vm424, %v671, %v1083
        %v1089 = vsel %vm424, %v747, %v1085
        %v1090 = vpack.c.bf16 %v1089, %v1088
        %v1091 = vld [vmem:[#allocation2] sm:$0xf]
        %v1092 = vld [vmem:[#allocation2 + $0x4] sm:$0xf]
        %v1093 = vld [vmem:[%s7] sm:$0x1]
        %v1094 = vlaneseq
        %v1095 = vshrl.u32 %v1094, 7
        %v1096 = vsub.s32 0, %v1095
        %v1097 = vrot.slane %v1093, %v1096
        %v1100 = vunpack.c.l.b16 %v1091
        %v1101 = vunpack.c.l.b16 %v1092
        %v1102 = vpack.c.b16 %v1101, %v1100
        %vm1104 = vcmask 130048
        %v1106 = vsel %vm1104, %v1090, 0
        %1108 = vmatprep.subr.bf16.mxu0 0
        %1109 = vmatpush1.bf16.msra.mxu0 0
        %1110 = vmatprep.subr.bf16.mxu0 0
        %1111 = vmatpush1.bf16.msra.mxu0 0
        %1112 = vmatprep.subr.bf16.mxu0 0
        %1113 = vmatpush1.bf16.msra.mxu0 0
        %1114 = vmatprep.subr.bf16.mxu0 0
        %1115 = vmatpush1.bf16.msra.mxu0 0
        %1116 = vmatprep.subr.bf16.mxu0 0
        %1117 = vmatpush1.bf16.msra.mxu0 0
        %1118 = vmatprep.subr.bf16.mxu0 0
        %1119 = vmatpush1.bf16.msra.mxu0 0
        %1120 = vmatprep.subr.bf16.mxu0 0
        %1121 = vmatpush1.bf16.msra.mxu0 0
        %1122 = vmatprep.subr.bf16.mxu0 0
        %1123 = vmatpush1.bf16.msra.mxu0 %v1102
        %1124 = vmatprep.subr.bf16.mxu0 0
        %1125 = vmatpush2.bf16.msra.mxu0 0
        %1126 = vmatprep.subr.bf16.mxu0 0
        %1127 = vmatpush2.bf16.msra.mxu0 0
        %1128 = vmatprep.subr.bf16.mxu0 0
        %1129 = vmatpush2.bf16.msra.mxu0 0
        %1130 = vmatprep.subr.bf16.mxu0 0
        %1131 = vmatpush2.bf16.msra.mxu0 0
        %1132 = vmatprep.subr.bf16.mxu0 0
        %1133 = vmatpush2.bf16.msra.mxu0 0
        %1134 = vmatprep.subr.bf16.mxu0 0
        %1135 = vmatpush2.bf16.msra.mxu0 0
        %1136 = vmatprep.subr.bf16.mxu0 0
        %1137 = vmatpush2.bf16.msra.mxu0 0
        %1138 = vmatprep.subr.bf16.mxu0 0
        %1139 = vmatpush2.bf16.msra.mxu0 0
        %1140 = vmatprep.mubr.bf16.mxu0 0
        %1141 = vmatmul.mubr.bf16.gmra.mxu0 %v1106
        %v1142 = vpop.f32.mrf.mxu0
        %v1143 = vadd.f32 %v1097, %v1142
        %v1144 = vpop.f32.mrf.mxu0
        %v1145 = vpop.f32.mrf.mxu0
        %v1146 = vadd.f32 %v1097, %v1145
        %v1147 = vpop.f32.mrf.mxu0
        %1148 = vdwg.mxu0
        %v1149 = vld [vmem:[%s7 + $0x1] sm:$0x1]
        %v1150 = vld [vmem:[%s7 + $0x2] sm:$0x1]
        %v1151 = vsel %vm376, %v1143, 0.0
        %1152 = vadd.xlane.f32.xlu0 %v1151
        %v1153 = vpop.xlane.xlu0 %1152
        %v1154 = vsel %vm376, %v1146, 0.0
        %1155 = vadd.xlane.f32.xlu0 %v1154
        %v1156 = vpop.xlane.xlu0 %1155
        %v1157 = vrcp.pop 32.0
        %v1158 = vmul.f32 %v1153, %v1157
        %v1159 = vmul.f32 %v1156, %v1157
        %v1160 = vsub.f32 %v1143, %v1158
        %v1161 = vsub.f32 %v1146, %v1159
        %v1162 = vmul.f32 %v1160, %v1160
        %v1163 = vmul.f32 %v1161, %v1161
        %v1164 = vsel %vm376, %v1162, 0.0
        %1165 = vadd.xlane.f32.xlu0 %v1164
        %v1166 = vpop.xlane.xlu0 %1165
        %v1167 = vsel %vm376, %v1163, 0.0
        %1168 = vadd.xlane.f32.xlu0 %v1167
        %v1169 = vpop.xlane.xlu0 %1168
        %v1170 = vmul.f32 %v1166, %v1157
        %v1171 = vmul.f32 %v1169, %v1157
        %v1172 = vadd.f32 %v1170, 1e-05
        %v1173 = vadd.f32 %v1171, 1e-05
        %v1174 = vrsqrt.pop %v1172
        %v1175 = vrsqrt.pop %v1173
        %v1176 = vmul.f32 %v1160, %v1174
        %v1177 = vmul.f32 %v1161, %v1175
        %v1178 = vlaneseq
        %v1179 = vshrl.u32 %v1178, 7
        %v1180 = vsub.s32 0, %v1179
        %v1181 = vrot.slane %v1149, %v1180
        %v1182 = vmul.f32 %v1176, %v1181
        %v1183 = vmul.f32 %v1177, %v1181
        %v1184 = vlaneseq
        %v1185 = vshrl.u32 %v1184, 7
        %v1186 = vsub.s32 0, %v1185
        %v1187 = vrot.slane %v1150, %v1186
        %v1188 = vadd.f32 %v1182, %v1187
        %v1189 = vadd.f32 %v1183, %v1187
        %v1190 = vadd.f32 %v350, %v1188
        %v1191 = vadd.f32 %v351, %v1189
        %v1192 = vpack.c.bf16 %v1191, %v1190
        %v1193 = vld [vmem:[#allocation5] sm:$0xf]
        %v1194 = vld [vmem:[#allocation5 + $0x4] sm:$0xf]
        %v1195 = vld [vmem:[#allocation5 + $0x8] sm:$0xf]
        %v1196 = vld [vmem:[#allocation5 + $0xc] sm:$0xf]
        %v1197 = vld [vmem:[#allocation7] sm:$0x1]
        %v1199 = vlaneseq
        %v1200 = vshrl.u32 %v1199, 7
        %v1201 = vsub.s32 0, %v1200
        %v1202 = vrot.slane %v1197, %v1201
        %v1208 = vunpack.c.l.b16 %v1193
        %v1209 = vunpack.c.l.b16 %v1194
        %v1210 = vunpack.c.l.b16 %v1195
        %v1211 = vunpack.c.l.b16 %v1196
        %v1212 = vpack.c.b16 %v1209, %v1208
        %v1213 = vpack.c.b16 %v1211, %v1210
        %v1217 = vsel %vm376, %v1192, 0
        %1219 = vmatprep.subr.bf16.mxu0 0
        %1220 = vmatpush1.bf16.msra.mxu0 0
        %1221 = vmatprep.subr.bf16.mxu0 0
        %1222 = vmatpush1.bf16.msra.mxu0 0
        %1223 = vmatprep.subr.bf16.mxu0 0
        %1224 = vmatpush1.bf16.msra.mxu0 0
        %1225 = vmatprep.subr.bf16.mxu0 0
        %1226 = vmatpush1.bf16.msra.mxu0 0
        %1227 = vmatprep.subr.bf16.mxu0 0
        %1228 = vmatpush1.bf16.msra.mxu0 0
        %1229 = vmatprep.subr.bf16.mxu0 0
        %1230 = vmatpush1.bf16.msra.mxu0 0
        %1231 = vmatprep.subr.bf16.mxu0 0
        %1232 = vmatpush1.bf16.msra.mxu0 %v1213
        %1233 = vmatprep.subr.bf16.mxu0 0
        %1234 = vmatpush1.bf16.msra.mxu0 %v1212
        %1235 = vmatprep.subr.bf16.mxu0 0
        %1236 = vmatpush2.bf16.msra.mxu0 0
        %1237 = vmatprep.subr.bf16.mxu0 0
        %1238 = vmatpush2.bf16.msra.mxu0 0
        %1239 = vmatprep.subr.bf16.mxu0 0
        %1240 = vmatpush2.bf16.msra.mxu0 0
        %1241 = vmatprep.subr.bf16.mxu0 0
        %1242 = vmatpush2.bf16.msra.mxu0 0
        %1243 = vmatprep.subr.bf16.mxu0 0
        %1244 = vmatpush2.bf16.msra.mxu0 0
        %1245 = vmatprep.subr.bf16.mxu0 0
        %1246 = vmatpush2.bf16.msra.mxu0 0
        %1247 = vmatprep.subr.bf16.mxu0 0
        %1248 = vmatpush2.bf16.msra.mxu0 0
        %1249 = vmatprep.subr.bf16.mxu0 0
        %1250 = vmatpush2.bf16.msra.mxu0 0
        %1251 = vmatprep.mubr.bf16.mxu0 0
        %1252 = vmatmul.mubr.bf16.gmra.mxu0 %v1217
        %v1253 = vpop.f32.mrf.mxu0
        %v1254 = vadd.f32 %v1202, %v1253
        %v1255 = vpop.f32.mrf.mxu0
        %v1256 = vpop.f32.mrf.mxu0
        %v1257 = vadd.f32 %v1202, %v1256
        %v1258 = vpop.f32.mrf.mxu0
        %1259 = vdwg.mxu0
        %v1260 = vmul.f32 %v1254, 0.5
        %v1261 = vmul.f32 %v1257, 0.5
        %v1262 = vmul.f32 %v1254, 0.70710677
        %v1263 = vmul.f32 %v1257, 0.70710677
        %v1264 = verf.f32.pop %v1262
        %v1265 = verf.f32.pop %v1263
        %v1266 = vadd.f32 %v1264, 1.0
        %v1267 = vadd.f32 %v1265, 1.0
        %v1268 = vmul.f32 %v1260, %v1266
        %v1269 = vmul.f32 %v1261, %v1267
        %v1270 = vpack.c.bf16 %v1269, %v1268
        %v1271 = vld [vmem:[%s6] sm:$0xf]
        %v1272 = vld [vmem:[%s6 + $0x4] sm:$0xf]
        %v1273 = vld [vmem:[%s6 + $0x8] sm:$0xf]
        %v1274 = vld [vmem:[%s6 + $0xc] sm:$0xf]
        %v1275 = vld [vmem:[%s6 + $0x10] sm:$0xf]
        %v1276 = vld [vmem:[%s6 + $0x14] sm:$0xf]
        %v1277 = vld [vmem:[%s6 + $0x18] sm:$0xf]
        %v1278 = vld [vmem:[%s6 + $0x1c] sm:$0xf]
        %v1279 = vld [vmem:[%s7 + $0x3] sm:$0x1]
        %v1280 = vlaneseq
        %v1281 = vshrl.u32 %v1280, 7
        %v1282 = vsub.s32 0, %v1281
        %v1283 = vrot.slane %v1279, %v1282
        %v1292 = vunpack.c.l.b16 %v1271
        %v1293 = vunpack.c.l.b16 %v1272
        %v1294 = vunpack.c.l.b16 %v1273
        %v1295 = vunpack.c.l.b16 %v1274
        %v1296 = vunpack.c.l.b16 %v1275
        %v1297 = vunpack.c.l.b16 %v1276
        %v1298 = vunpack.c.l.b16 %v1277
        %v1299 = vunpack.c.l.b16 %v1278
        %v1300 = vpack.c.b16 %v1293, %v1292
        %v1301 = vpack.c.b16 %v1295, %v1294
        %v1302 = vpack.c.b16 %v1297, %v1296
        %v1303 = vpack.c.b16 %v1299, %v1298
        %vm1308 = vcmask 523264
        %v1310 = vsel %vm1308, %v1270, 0
        %1312 = vmatprep.subr.bf16.mxu0 0
        %1313 = vmatpush1.bf16.msra.mxu0 0
        %1314 = vmatprep.subr.bf16.mxu0 0
        %1315 = vmatpush1.bf16.msra.mxu0 0
        %1316 = vmatprep.subr.bf16.mxu0 0
        %1317 = vmatpush1.bf16.msra.mxu0 0
        %1318 = vmatprep.subr.bf16.mxu0 0
        %1319 = vmatpush1.bf16.msra.mxu0 0
        %1320 = vmatprep.subr.bf16.mxu0 0
        %1321 = vmatpush1.bf16.msra.mxu0 %v1303
        %1322 = vmatprep.subr.bf16.mxu0 0
        %1323 = vmatpush1.bf16.msra.mxu0 %v1302
        %1324 = vmatprep.subr.bf16.mxu0 0
        %1325 = vmatpush1.bf16.msra.mxu0 %v1301
        %1326 = vmatprep.subr.bf16.mxu0 0
        %1327 = vmatpush1.bf16.msra.mxu0 %v1300
        %1328 = vmatprep.subr.bf16.mxu0 0
        %1329 = vmatpush2.bf16.msra.mxu0 0
        %1330 = vmatprep.subr.bf16.mxu0 0
        %1331 = vmatpush2.bf16.msra.mxu0 0
        %1332 = vmatprep.subr.bf16.mxu0 0
        %1333 = vmatpush2.bf16.msra.mxu0 0
        %1334 = vmatprep.subr.bf16.mxu0 0
        %1335 = vmatpush2.bf16.msra.mxu0 0
        %1336 = vmatprep.subr.bf16.mxu0 0
        %1337 = vmatpush2.bf16.msra.mxu0 0
        %1338 = vmatprep.subr.bf16.mxu0 0
        %1339 = vmatpush2.bf16.msra.mxu0 0
        %1340 = vmatprep.subr.bf16.mxu0 0
        %1341 = vmatpush2.bf16.msra.mxu0 0
        %1342 = vmatprep.subr.bf16.mxu0 0
        %1343 = vmatpush2.bf16.msra.mxu0 0
        %1344 = vmatprep.mubr.bf16.mxu0 0
        %1345 = vmatmul.mubr.bf16.gmra.mxu0 %v1310
        %v1346 = vpop.f32.mrf.mxu0
        %v1347 = vadd.f32 %v1283, %v1346
        %v1348 = vpop.f32.mrf.mxu0
        %v1349 = vpop.f32.mrf.mxu0
        %v1350 = vadd.f32 %v1283, %v1349
        %v1351 = vpop.f32.mrf.mxu0
        %1352 = vdwg.mxu0
        %v1353 = vld [vmem:[%s7 + $0x4] sm:$0x1]
        %v1354 = vld [vmem:[%s7 + $0x5] sm:$0x1]
        %v1355 = vsel %vm376, %v1347, 0.0
        %1356 = vadd.xlane.f32.xlu0 %v1355
        %v1357 = vpop.xlane.xlu0 %1356
        %v1358 = vsel %vm376, %v1350, 0.0
        %1359 = vadd.xlane.f32.xlu0 %v1358
        %v1360 = vpop.xlane.xlu0 %1359
        %v1361 = vmul.f32 %v1357, %v1157
        %v1362 = vmul.f32 %v1360, %v1157
        %v1363 = vsub.f32 %v1347, %v1361
        %v1364 = vsub.f32 %v1350, %v1362
        %v1365 = vmul.f32 %v1363, %v1363
        %v1366 = vmul.f32 %v1364, %v1364
        %v1367 = vsel %vm376, %v1365, 0.0
        %1368 = vadd.xlane.f32.xlu0 %v1367
        %v1369 = vpop.xlane.xlu0 %1368
        %v1370 = vsel %vm376, %v1366, 0.0
        %1371 = vadd.xlane.f32.xlu0 %v1370
        %v1372 = vpop.xlane.xlu0 %1371
        %v1373 = vmul.f32 %v1369, %v1157
        %v1374 = vmul.f32 %v1372, %v1157
        %v1375 = vadd.f32 %v1373, 1e-05
        %v1376 = vadd.f32 %v1374, 1e-05
        %v1377 = vrsqrt.pop %v1375
        %v1378 = vrsqrt.pop %v1376
        %v1379 = vmul.f32 %v1363, %v1377
        %v1380 = vmul.f32 %v1364, %v1378
        %v1381 = vlaneseq
        %v1382 = vshrl.u32 %v1381, 7
        %v1383 = vsub.s32 0, %v1382
        %v1384 = vrot.slane %v1353, %v1383
        %v1385 = vmul.f32 %v1379, %v1384
        %v1386 = vmul.f32 %v1380, %v1384
        %v1387 = vlaneseq
        %v1388 = vshrl.u32 %v1387, 7
        %v1389 = vsub.s32 0, %v1388
        %v1390 = vrot.slane %v1354, %v1389
        %v1391 = vadd.f32 %v1385, %v1390
        %v1392 = vadd.f32 %v1386, %v1390
        %v1393 = vadd.f32 %v1190, %v1391
        %v1394 = vadd.f32 %v1191, %v1392
        %1395 = vst.msk [vmem:[%s341] sm:$0xff] %vm376, %v1393
        %1396 = vst.msk [vmem:[%s341 + $0x8] sm:$0xff] %vm376, %v1394
        %s1397 = sand.u32 %s205, 1
        %s1398 = scalar_lea.sflag [#allocation4], %s1397
        %s1399 = sand.u32 %s205, 1
        %s1400 = smul.addr %s1399, 16
        %s1401 = scalar_lea.vmem [#allocation8], %s1400
        // Predicated region
        $region65: #{tpu_custom_call.1} parent=51 // pred_check
          %p1402 = pneg %p215
        $region66: #{tpu_custom_call.1} parent=51 // pred_check_branch
          %1404 = sbr.rel (%p1402) target = $region68
        $region67: #{tpu_custom_call.1} parent=51 // pred_region
          %s1405 = smul.u32 2, %s24
          %s1407 = ssub.s32 256, 256
          %1408 = vsyncadd %s1398, %s1407
          %s1409 = smul.addr %s1405, 128
          %s1410 = scalar_lea.hbm %s8, %s1409
          %s1411 = sshll.u32 %s1401, 4
          %s1412 = int_to_ptr.vmem [resolvable:$true] %s1411
          %1417 = dma.vmem_to_hbm [thread:$0]  %s1412, 256, %s1410, %s1398, 128, 128, 8
        $region68: #{tpu_custom_call.1} parent=51 // pred_fallthru
          _
      $region52: #{tpu_custom_call.1} parent=5 // pred_fallthru
        _
      %p1418 = scmp.le.s32.totalorder 2, %s19
      // Predicated region
      $region69: #{tpu_custom_call.1} parent=5 // pred_check
        %p1419 = pneg %p1418
      $region70: #{tpu_custom_call.1} parent=5 // pred_check_branch
        %1421 = sbr.rel (%p1419) target = $region72
      $region71: #{tpu_custom_call.1} parent=5 // pred_region
        %s1422 = ssub.s32 %s19, 2
        // Predicated region
        $region73: #{tpu_custom_call.1} parent=71 // pred_check
          %p1423 = pneg %p221
        $region74: #{tpu_custom_call.1} parent=71 // pred_check_branch
          %1425 = sbr.rel (%p1423) target = $region76
        $region75: #{tpu_custom_call.1} parent=71 // pred_region
          %s1426 = sand.u32 %s206, 1
          %s1427 = scalar_lea.sflag [#allocation4], %s1426
          %s1428 = sand.u32 %s206, 1
          %s1429 = smul.addr %s1428, 16
          %s1430 = scalar_lea.vmem [#allocation8], %s1429
          %1431 = dma.done %s1427, 256
        $region76: #{tpu_custom_call.1} parent=71 // pred_fallthru
          _
      $region72: #{tpu_custom_call.1} parent=5 // pred_fallthru
        _
    $region6: #{tpu_custom_call.1} parent=1 // loop_footer
      %s23 = sadd.s32 1, %s19
    $region7: #{tpu_custom_call.1} parent=1 // loop_footer_branch
      %18 = sbr.rel target = $region3
    $region8: #{tpu_custom_call.1} parent=1 // loop_exit
      _
    %1432 = vsyncpa [#allocation3], 1
    %s1433 = scalar_lea.sflag [#allocation3], 1
    %1434 = vsyncpa %s1433, 1
    %1435 = vsyncpa [#allocation6], 1
    %1436 = vsyncpa [#allocation4], 1
    %s1437 = scalar_lea.sflag [#allocation4], 1
    %1438 = vsyncpa %s1437, 1

</llo_original>
